<compile_context>
chip_gen: v7x
topology: tpu7x:2x2x1
jax: 0.10.0
libtpu: 0.0.40
codegen_flags: <defaults>
</compile_context>

<pallas_src>
import functools

import jax
import jax.numpy as jnp
from jax.experimental import pallas as pl
from jax.experimental.pallas import tpu as pltpu

D1 = 512            # conv1 output width
DP = 128            # lane-dense padded width for conv2/conv3/conv4 outputs
NP = 128            # node count padded to full MXU / lane width
FP = 128            # in_features padded to full lane width
BIAS_W = D1 + 3 * DP  # 896: packed bias buffer (128-aligned slots)


def fused_gcn_kernel(a_ref, x_ref, w1_ref, w2_ref, w3_ref, w4_ref, bias_ref,
                     o_ref):
    a = a_ref[0]            # bf16 [NP, NP]   (zero-padded A_hat for this graph)
    x = x_ref[0]            # bf16 [NP, FP]

    # ---- Layer 1: in_features -> 512  (d_in < d_out: aggregate first) ----
    ax = jnp.dot(a, x, preferred_element_type=jnp.float32)            # [NP, FP]
    h1 = jnp.dot(ax.astype(jnp.bfloat16), w1_ref[...],
                 preferred_element_type=jnp.float32)                  # [NP, 512]
    h1 = jnp.maximum(h1 + bias_ref[:, 0:512], 0.0)                    # f32 epilogue

    # ---- Layer 2: 512 -> 64 (padded to 128)  (transform first) ----
    hw2 = jnp.dot(h1.astype(jnp.bfloat16), w2_ref[...],
                  preferred_element_type=jnp.float32)                 # [NP, 128]
    h2 = jnp.dot(a, hw2.astype(jnp.bfloat16),
                 preferred_element_type=jnp.float32)
    h2 = jnp.maximum(h2 + bias_ref[:, 512:640], 0.0)
    # (dropout = identity in eval mode)

    # ---- Layer 3: 64 -> 16 (both padded to 128)  (transform first) ----
    hw3 = jnp.dot(h2.astype(jnp.bfloat16), w3_ref[...],
                  preferred_element_type=jnp.float32)
    h3 = jnp.dot(a, hw3.astype(jnp.bfloat16),
                 preferred_element_type=jnp.float32)
    h3 = jnp.maximum(h3 + bias_ref[:, 640:768], 0.0)
    # (dropout = identity in eval mode)

    # ---- Layer 4: 16 -> out_features (padded to 128), ReLU per reference ----
    hw4 = jnp.dot(h3.astype(jnp.bfloat16), w4_ref[...],
                  preferred_element_type=jnp.float32)
    h4 = jnp.dot(a, hw4.astype(jnp.bfloat16),
                 preferred_element_type=jnp.float32)
    o_ref[0] = jnp.maximum(h4 + bias_ref[:, 768:896], 0.0).astype(o_ref.dtype)


# ----------------------------------------------------------------------------
# One-time prepack (hoisted out of the hot path)
# ----------------------------------------------------------------------------
def prepack_params(params):
    """Pad weights to lane-dense shapes, pack biases, cast to bf16 — once."""
    (w1, b1), (w2, b2), (w3, b3), (w4, b4) = params
    f_in = w1.shape[0]

    w1p = jnp.zeros((FP, D1), jnp.float32).at[:f_in, :].set(w1)
    w2p = jnp.zeros((D1, DP), jnp.float32).at[:, :w2.shape[1]].set(w2)
    w3p = jnp.zeros((DP, DP), jnp.float32).at[:w3.shape[0], :w3.shape[1]].set(w3)
    w4p = jnp.zeros((DP, DP), jnp.float32).at[:w4.shape[0], :w4.shape[1]].set(w4)

    bias = jnp.zeros((1, BIAS_W), jnp.float32)
    bias = bias.at[0, 0:512].set(b1)
    bias = bias.at[0, 512:512 + b2.shape[0]].set(b2)
    bias = bias.at[0, 640:640 + b3.shape[0]].set(b3)
    bias = bias.at[0, 768:768 + b4.shape[0]].set(b4)

    return (w1p.astype(jnp.bfloat16), w2p.astype(jnp.bfloat16),
            w3p.astype(jnp.bfloat16), w4p.astype(jnp.bfloat16), bias)


def prepack_graphs(a_hat):
    """[G, N, N] f32 normalized adjacency -> [G, NP, NP] bf16, zero-padded."""
    g, n, _ = a_hat.shape
    a_pad = jnp.pad(a_hat, ((0, 0), (0, NP - n), (0, NP - n)))
    return a_pad.astype(jnp.bfloat16)


# ----------------------------------------------------------------------------
# Jitted forward: pad X -> one pallas_call over the graph batch -> slice
# ----------------------------------------------------------------------------
@functools.partial(jax.jit, static_argnames=("out_features",))
def gcn_forward(a_pad_bf, x, packed, *, out_features):
    w1, w2, w3, w4, bias = packed
    g = a_pad_bf.shape[0]
    n, f_in = x.shape[-2], x.shape[-1]

    x_pad = jnp.pad(x, ((0, 0), (0, NP - n), (0, FP - f_in))).astype(jnp.bfloat16)

    macs_per_graph = (NP * NP * FP + NP * FP * D1        # layer 1 (agg first)
                      + NP * D1 * DP + NP * NP * DP      # layer 2
                      + NP * DP * DP + NP * NP * DP      # layer 3
                      + NP * DP * DP + NP * NP * DP)     # layer 4
    bytes_accessed = (a_pad_bf.size * 2 + x_pad.size * 2
                      + (w1.size + w2.size + w3.size + w4.size) * 2
                      + bias.size * 4 + g * NP * DP * 4)

    out_pad = pl.pallas_call(
        fused_gcn_kernel,
        out_shape=jax.ShapeDtypeStruct((g, NP, DP), jnp.float32),
        grid_spec=pltpu.PrefetchScalarGridSpec(
            num_scalar_prefetch=0,
            grid=(g,),
            in_specs=[
                pl.BlockSpec((1, NP, NP), lambda i: (i, 0, 0)),   # A_hat (per graph)
                pl.BlockSpec((1, NP, FP), lambda i: (i, 0, 0)),   # X     (per graph)
                pl.BlockSpec((FP, D1), lambda i: (0, 0)),         # W1 (padded rows)
                pl.BlockSpec((D1, DP), lambda i: (0, 0)),         # W2 (padded)
                pl.BlockSpec((DP, DP), lambda i: (0, 0)),         # W3 (padded)
                pl.BlockSpec((DP, DP), lambda i: (0, 0)),         # W4 (padded)
                pl.BlockSpec((1, BIAS_W), lambda i: (0, 0)),      # packed biases
            ],
            out_specs=pl.BlockSpec((1, NP, DP), lambda i: (i, 0, 0)),
        ),
        compiler_params=pltpu.CompilerParams(
            dimension_semantics=("parallel",)),       # shards graphs across TCs (v7x)
        cost_estimate=pl.CostEstimate(
            flops=2 * g * macs_per_graph, transcendentals=0,
            bytes_accessed=bytes_accessed),
    )(a_pad_bf, x_pad, w1, w2, w3, w4, bias)

    return out_pad[:, :n, :out_features]


# ----------------------------------------------------------------------------
# Parameter / data construction (deterministic)
# ----------------------------------------------------------------------------
def glorot(key, shape):
    fan_in, fan_out = shape
    limit = jnp.sqrt(6.0 / (fan_in + fan_out))
    return jax.random.uniform(key, shape, jnp.float32, -limit, limit)


def init_params(key, in_features, out_features):
    dims = [in_features, 512, 64, 16, out_features]
    params = []
    for i in range(4):
        key, wk = jax.random.split(key)
        w = glorot(wk, (dims[i], dims[i + 1]))
        b = jnp.zeros((dims[i + 1],), jnp.float32)
        params.append((w, b))
    return params


def build_normalized_adjacency(key, n_nodes):
    # Deterministic synthetic undirected graph, symmetrically normalized
    # (DGL GraphConv norm='both'), no self-loops.
    probs = jax.random.uniform(key, (n_nodes, n_nodes))
    adj = (probs < 0.15).astype(jnp.float32)
    adj = jnp.maximum(adj, adj.T)                      # symmetrize
    adj = adj * (1.0 - jnp.eye(n_nodes, dtype=jnp.float32))
    deg = adj.sum(axis=1)
    d_inv_sqrt = jnp.where(deg > 0, 1.0 / jnp.sqrt(jnp.maximum(deg, 1e-12)), 0.0)
    return adj * d_inv_sqrt[:, None] * d_inv_sqrt[None, :]


if __name__ == "__main__":
    key = jax.random.PRNGKey(0)
    k_graph, k_feat, k_param = jax.random.split(key, 3)

    G = 2             # batch of graphs (amortizes launch cost, feeds both v7x TCs)
    N = 64            # nodes per graph
    in_features = 32
    out_features = 8

    gkeys = jax.random.split(k_graph, G)
    a_hat = jnp.stack([build_normalized_adjacency(k, N) for k in gkeys])  # [G,N,N]
    x = jax.random.normal(k_feat, (G, N, in_features), jnp.float32)       # [G,N,F]
    params = init_params(k_param, in_features, out_features)

    # One-time prepack (NOT in the per-call hot path).
    packed = prepack_params(params)
    a_pad_bf = prepack_graphs(a_hat)

    out = gcn_forward(a_pad_bf, x, packed, out_features=out_features)
    out = jax.block_until_ready(out)

    assert out.shape == (G, N, out_features), out.shape
    assert out.dtype == jnp.float32
    assert bool(jnp.all(jnp.isfinite(out)))
    print("KERNEL_OK")
</pallas_src>

<mosaic_0001>
module attributes {stable_mosaic.version = 11 : i64} {
  func.func @fused_gcn_kernel(%arg0: i32, %arg1: memref<1x128x128xbf16, #tpu.memory_space<vmem>>, %arg2: memref<1x128x128xbf16, #tpu.memory_space<vmem>>, %arg3: memref<128x512xbf16, #tpu.memory_space<vmem>>, %arg4: memref<512x128xbf16, #tpu.memory_space<vmem>>, %arg5: memref<128x128xbf16, #tpu.memory_space<vmem>>, %arg6: memref<128x128xbf16, #tpu.memory_space<vmem>>, %arg7: memref<1x896xf32, #tpu.memory_space<vmem>>, %arg8: memref<1x128x128xf32, #tpu.memory_space<vmem>>) attributes {dimension_semantics = [#tpu.dimension_semantics<parallel>], iteration_bounds = array<i64: 2>, scalar_prefetch = 0 : i64, scratch_operands = 0 : i64, tpu.core_type = #tpu.core_type<tc>, window_params = [{transform_indices = @transform_0, window_bounds = array<i64: 1, 128, 128>}, {transform_indices = @transform_1, window_bounds = array<i64: 1, 128, 128>}, {pipeline_mode = #tpu.pipeline_mode<synchronous>, transform_indices = @transform_2, window_bounds = array<i64: 128, 512>}, {pipeline_mode = #tpu.pipeline_mode<synchronous>, transform_indices = @transform_3, window_bounds = array<i64: 512, 128>}, {pipeline_mode = #tpu.pipeline_mode<synchronous>, transform_indices = @transform_4, window_bounds = array<i64: 128, 128>}, {pipeline_mode = #tpu.pipeline_mode<synchronous>, transform_indices = @transform_5, window_bounds = array<i64: 128, 128>}, {pipeline_mode = #tpu.pipeline_mode<synchronous>, transform_indices = @transform_6, window_bounds = array<i64: 1, 896>}, {transform_indices = @transform_7, window_bounds = array<i64: 1, 128, 128>}]} {
    %c0 = arith.constant 0 : index
    %c0_0 = arith.constant 0 : index
    %c0_1 = arith.constant 0 : index
    %0 = vector.load %arg1[%c0, %c0_0, %c0_1] : memref<1x128x128xbf16, #tpu.memory_space<vmem>>, vector<1x128x128xbf16>
    %1 = vector.shape_cast %0 : vector<1x128x128xbf16> to vector<128x128xbf16>
    %c0_2 = arith.constant 0 : index
    %c0_3 = arith.constant 0 : index
    %c0_4 = arith.constant 0 : index
    %2 = vector.load %arg2[%c0_2, %c0_3, %c0_4] : memref<1x128x128xbf16, #tpu.memory_space<vmem>>, vector<1x128x128xbf16>
    %3 = vector.shape_cast %2 : vector<1x128x128xbf16> to vector<128x128xbf16>
    %cst = arith.constant dense<0.000000e+00> : vector<128x128xf32>
    %4 = tpu.matmul %1, %3, %cst {dimension_numbers = #tpu.dot_dimension_numbers<[1], [0], [0], [1], [0, 0, 1, 1], [], []>} : vector<128x128xbf16>, vector<128x128xbf16>, vector<128x128xf32> -> vector<128x128xf32>
    %5 = arith.truncf %4 : vector<128x128xf32> to vector<128x128xbf16>
    %c0_5 = arith.constant 0 : index
    %c0_6 = arith.constant 0 : index
    %6 = vector.load %arg3[%c0_5, %c0_6] : memref<128x512xbf16, #tpu.memory_space<vmem>>, vector<128x512xbf16>
    %cst_7 = arith.constant dense<0.000000e+00> : vector<128x512xf32>
    %7 = tpu.matmul %5, %6, %cst_7 {dimension_numbers = #tpu.dot_dimension_numbers<[1], [0], [0], [1], [0, 0, 1, 1], [], []>} : vector<128x128xbf16>, vector<128x512xbf16>, vector<128x512xf32> -> vector<128x512xf32>
    %c0_8 = arith.constant 0 : index
    %c0_9 = arith.constant 0 : index
    %8 = vector.load %arg7[%c0_8, %c0_9] : memref<1x896xf32, #tpu.memory_space<vmem>>, vector<1x512xf32>
    %9 = vector.broadcast %8 : vector<1x512xf32> to vector<128x512xf32>
    %10 = arith.addf %7, %9 : vector<128x512xf32>
    %cst_10 = arith.constant 0.000000e+00 : f32
    %11 = vector.broadcast %cst_10 : f32 to vector<128x512xf32>
    %12 = arith.maximumf %10, %11 : vector<128x512xf32>
    %13 = arith.truncf %12 : vector<128x512xf32> to vector<128x512xbf16>
    %c0_11 = arith.constant 0 : index
    %c0_12 = arith.constant 0 : index
    %14 = vector.load %arg4[%c0_11, %c0_12] : memref<512x128xbf16, #tpu.memory_space<vmem>>, vector<512x128xbf16>
    %cst_13 = arith.constant dense<0.000000e+00> : vector<128x128xf32>
    %15 = tpu.matmul %13, %14, %cst_13 {dimension_numbers = #tpu.dot_dimension_numbers<[1], [0], [0], [1], [0, 0, 1, 1], [], []>} : vector<128x512xbf16>, vector<512x128xbf16>, vector<128x128xf32> -> vector<128x128xf32>
    %16 = arith.truncf %15 : vector<128x128xf32> to vector<128x128xbf16>
    %cst_14 = arith.constant dense<0.000000e+00> : vector<128x128xf32>
    %17 = tpu.matmul %1, %16, %cst_14 {dimension_numbers = #tpu.dot_dimension_numbers<[1], [0], [0], [1], [0, 0, 1, 1], [], []>} : vector<128x128xbf16>, vector<128x128xbf16>, vector<128x128xf32> -> vector<128x128xf32>
    %c0_15 = arith.constant 0 : index
    %c512 = arith.constant 512 : index
    %18 = vector.load %arg7[%c0_15, %c512] : memref<1x896xf32, #tpu.memory_space<vmem>>, vector<1x128xf32>
    %19 = vector.broadcast %18 : vector<1x128xf32> to vector<128x128xf32>
    %20 = arith.addf %17, %19 : vector<128x128xf32>
    %cst_16 = arith.constant 0.000000e+00 : f32
    %21 = vector.broadcast %cst_16 : f32 to vector<128x128xf32>
    %22 = arith.maximumf %20, %21 : vector<128x128xf32>
    %23 = arith.truncf %22 : vector<128x128xf32> to vector<128x128xbf16>
    %c0_17 = arith.constant 0 : index
    %c0_18 = arith.constant 0 : index
    %24 = vector.load %arg5[%c0_17, %c0_18] : memref<128x128xbf16, #tpu.memory_space<vmem>>, vector<128x128xbf16>
    %cst_19 = arith.constant dense<0.000000e+00> : vector<128x128xf32>
    %25 = tpu.matmul %23, %24, %cst_19 {dimension_numbers = #tpu.dot_dimension_numbers<[1], [0], [0], [1], [0, 0, 1, 1], [], []>} : vector<128x128xbf16>, vector<128x128xbf16>, vector<128x128xf32> -> vector<128x128xf32>
    %26 = arith.truncf %25 : vector<128x128xf32> to vector<128x128xbf16>
    %cst_20 = arith.constant dense<0.000000e+00> : vector<128x128xf32>
    %27 = tpu.matmul %1, %26, %cst_20 {dimension_numbers = #tpu.dot_dimension_numbers<[1], [0], [0], [1], [0, 0, 1, 1], [], []>} : vector<128x128xbf16>, vector<128x128xbf16>, vector<128x128xf32> -> vector<128x128xf32>
    %c0_21 = arith.constant 0 : index
    %c640 = arith.constant 640 : index
    %28 = vector.load %arg7[%c0_21, %c640] : memref<1x896xf32, #tpu.memory_space<vmem>>, vector<1x128xf32>
    %29 = vector.broadcast %28 : vector<1x128xf32> to vector<128x128xf32>
    %30 = arith.addf %27, %29 : vector<128x128xf32>
    %cst_22 = arith.constant 0.000000e+00 : f32
    %31 = vector.broadcast %cst_22 : f32 to vector<128x128xf32>
    %32 = arith.maximumf %30, %31 : vector<128x128xf32>
    %33 = arith.truncf %32 : vector<128x128xf32> to vector<128x128xbf16>
    %c0_23 = arith.constant 0 : index
    %c0_24 = arith.constant 0 : index
    %34 = vector.load %arg6[%c0_23, %c0_24] : memref<128x128xbf16, #tpu.memory_space<vmem>>, vector<128x128xbf16>
    %cst_25 = arith.constant dense<0.000000e+00> : vector<128x128xf32>
    %35 = tpu.matmul %33, %34, %cst_25 {dimension_numbers = #tpu.dot_dimension_numbers<[1], [0], [0], [1], [0, 0, 1, 1], [], []>} : vector<128x128xbf16>, vector<128x128xbf16>, vector<128x128xf32> -> vector<128x128xf32>
    %36 = arith.truncf %35 : vector<128x128xf32> to vector<128x128xbf16>
    %cst_26 = arith.constant dense<0.000000e+00> : vector<128x128xf32>
    %37 = tpu.matmul %1, %36, %cst_26 {dimension_numbers = #tpu.dot_dimension_numbers<[1], [0], [0], [1], [0, 0, 1, 1], [], []>} : vector<128x128xbf16>, vector<128x128xbf16>, vector<128x128xf32> -> vector<128x128xf32>
    %c0_27 = arith.constant 0 : index
    %c768 = arith.constant 768 : index
    %38 = vector.load %arg7[%c0_27, %c768] : memref<1x896xf32, #tpu.memory_space<vmem>>, vector<1x128xf32>
    %39 = vector.broadcast %38 : vector<1x128xf32> to vector<128x128xf32>
    %40 = arith.addf %37, %39 : vector<128x128xf32>
    %cst_28 = arith.constant 0.000000e+00 : f32
    %41 = vector.broadcast %cst_28 : f32 to vector<128x128xf32>
    %42 = arith.maximumf %40, %41 : vector<128x128xf32>
    %c0_29 = arith.constant 0 : index
    %c0_30 = arith.constant 0 : index
    %c0_31 = arith.constant 0 : index
    %43 = vector.load %arg8[%c0_29, %c0_30, %c0_31] : memref<1x128x128xf32, #tpu.memory_space<vmem>>, vector<1x128x128xf32>
    %44 = vector.shape_cast %43 : vector<1x128x128xf32> to vector<128x128xf32>
    %45 = vector.shape_cast %42 : vector<128x128xf32> to vector<1x128x128xf32>
    tpu.vector_store %arg8[%c0_29, %c0_30, %c0_31], %45 {strides = array<i32>} : memref<1x128x128xf32, #tpu.memory_space<vmem>>, vector<1x128x128xf32>,
    return
  }
  func.func @transform_0(%arg0: i32) -> (i32, i32, i32) {
    %c0_i32 = arith.constant 0 : i32
    %c0_i32_0 = arith.constant 0 : i32
    %c0_i32_1 = arith.constant 0 : i32
    return %arg0, %c0_i32, %c0_i32_0 : i32, i32, i32
  }
  func.func @transform_1(%arg0: i32) -> (i32, i32, i32) {
    %c0_i32 = arith.constant 0 : i32
    %c0_i32_0 = arith.constant 0 : i32
    %c0_i32_1 = arith.constant 0 : i32
    return %arg0, %c0_i32, %c0_i32_0 : i32, i32, i32
  }
  func.func @transform_2(%arg0: i32) -> (i32, i32) {
    %c0_i32 = arith.constant 0 : i32
    %c0_i32_0 = arith.constant 0 : i32
    %c0_i32_1 = arith.constant 0 : i32
    return %c0_i32, %c0_i32_0 : i32, i32
  }
  func.func @transform_3(%arg0: i32) -> (i32, i32) {
    %c0_i32 = arith.constant 0 : i32
    %c0_i32_0 = arith.constant 0 : i32
    %c0_i32_1 = arith.constant 0 : i32
    return %c0_i32, %c0_i32_0 : i32, i32
  }
  func.func @transform_4(%arg0: i32) -> (i32, i32) {
    %c0_i32 = arith.constant 0 : i32
    %c0_i32_0 = arith.constant 0 : i32
    %c0_i32_1 = arith.constant 0 : i32
    return %c0_i32, %c0_i32_0 : i32, i32
  }
  func.func @transform_5(%arg0: i32) -> (i32, i32) {
    %c0_i32 = arith.constant 0 : i32
    %c0_i32_0 = arith.constant 0 : i32
    %c0_i32_1 = arith.constant 0 : i32
    return %c0_i32, %c0_i32_0 : i32, i32
  }
  func.func @transform_6(%arg0: i32) -> (i32, i32) {
    %c0_i32 = arith.constant 0 : i32
    %c0_i32_0 = arith.constant 0 : i32
    %c0_i32_1 = arith.constant 0 : i32
    return %c0_i32, %c0_i32_0 : i32, i32
  }
  func.func @transform_7(%arg0: i32) -> (i32, i32, i32) {
    %c0_i32 = arith.constant 0 : i32
    %c0_i32_0 = arith.constant 0 : i32
    %c0_i32_1 = arith.constant 0 : i32
    return %arg0, %c0_i32, %c0_i32_0 : i32, i32, i32
  }
}

</mosaic_0001>

<llo_original>
// kernel: gcn_forward.1
$region0: #{gcn_forward.1}
  #allocation0 [shape = 'u32[]', space=smem, size = 0x4, offset = 0x4, fixed_abs, tag = 'smem constant byte address 0x4 - core index']
  #allocation1 [shape = 'u32[144,128]{1,0:T(1,128)}', space=vmem, size = 0x12000, scoped, tag = 'internal scratch']
  %s0 = inlined_call_operand.vmem [shape: bf16[2,128,128], index: 0, kind: input, shape index: {}]
  %s1 = inlined_call_operand.vmem [shape: bf16[2,128,128], index: 1, kind: input, shape index: {}]
  %s2 = inlined_call_operand.vmem [shape: bf16[128,512], index: 2, kind: input, shape index: {}]
  %s3 = inlined_call_operand.hbm [shape: bf16[512,128], index: 3, kind: input, shape index: {}]
  %s4 = inlined_call_operand.hbm [shape: bf16[128,128], index: 4, kind: input, shape index: {}]
  %s5 = inlined_call_operand.hbm [shape: bf16[128,128], index: 5, kind: input, shape index: {}]
  %s6 = inlined_call_operand.vmem [shape: f32[1,896], index: 6, kind: input, shape index: {}]
  %s7 = inlined_call_operand.vmem [shape: f32[2,128,128], index: 7, kind: output, shape index: {}]
  %s8 = sld [smem:[#allocation0]]
  $region73: #{gcn_forward.1} parent=0
    _
  %s10 = ssub.s32 1, %s8
  %s11 = scalar_select 0, %s10, %s8
  $region1: #{gcn_forward.1} parent=0
    #allocation2 [shape = 'u8[131072]{0}', space=vmem, size = 0x20000, scoped, tag = 'input window, operand 3, single buffered']
    #allocation3 [shape = 's32[2]{0}', space=sflag, size = 0x8, scoped, tag = 'scoped memory for gcn_forward.1']
    #allocation4 [shape = 'u8[32768]{0}', space=vmem, size = 0x8000, scoped, tag = 'input window, operand 4, single buffered']
    #allocation5 [shape = 's32[1]{0}', space=sflag, size = 0x4, scoped, tag = 'scoped memory for gcn_forward.1']
    #allocation6 [shape = 'u8[32768]{0}', space=vmem, size = 0x8000, scoped, tag = 'input window, operand 5, single buffered']
    %12 = vsyncpa [#allocation3], 0
    %13 = vsyncpa [#allocation5], 0
    loop: start=0, step=1, limit=4
    $region2: #{gcn_forward.1} parent=1 // loop_pre_header
      _
    $region3: #{gcn_forward.1} parent=1 // loop_header
      %s15 = sphi 0, %s19
      %p16 = scmp.ge.s32.totalorder %s15, 4
      %s25 = sphi 0, %s27
      %s28 = sphi 0, %s25
      %s29 = sphi 0, %s28
      %s45 = sphi 0, %s29
      %s51 = sphi 0, %s53
      %s54 = sphi 0, %s51
      %s55 = sphi 0, %s54
      %s71 = sphi 0, %s55
      %s75 = sphi 0, %s75
      %s77 = sphi 0, %s75
      %s78 = sphi 0, %s77
      %s92 = sphi 0, %s78
      %s96 = sphi 0, %s96
      %s98 = sphi 0, %s96
      %s99 = sphi 0, %s98
      %s113 = sphi 0, %s99
      %s117 = sphi 0, %s117
      %s119 = sphi 0, %s117
      %s120 = sphi 0, %s119
      %s134 = sphi 0, %s120
      %s138 = sphi 0, %s138
      %s140 = sphi 0, %s138
      %s141 = sphi 0, %s140
      %s155 = sphi 0, %s141
      %s159 = sphi 0, %s159
      %s161 = sphi 0, %s159
      %s162 = sphi 0, %s161
      %s176 = sphi 0, %s162
      %s182 = sphi 0, %s184
      %s185 = sphi 0, %s182
      %s186 = sphi 0, %s185
      %s202 = sphi 0, %s186
    $region4: #{gcn_forward.1} parent=1 // loop_header_branch
      %18 = sbr.rel (%p16) target = $region8
    $region5: #{gcn_forward.1} parent=1 // loop_body
      %s20 = ssub.s32 %s15, 1
      %s21 = ssub.s32 %s15, 2
      %s22 = sadd.s32 %s15, 1
      %s23 = ssub.s32 %s15, %s22
      %p24 = scmp.eq.s32.totalorder %s23, 0
      %s26 = sadd.s32 %s25, 1
      %s27 = scalar_select %p24, %s25, %s26
      %p30 = pneg %p24
      %p31 = scmp.eq.s32.totalorder %s15, 1
      %p32 = por %p30, %p31
      %p33 = scmp.ne.s32.totalorder %s25, %s28
      %p34 = scmp.eq.s32.totalorder %s15, 0
      %p35 = por %p33, %p34
      %p36 = scmp.ne.s32.totalorder %s25, %s28
      %p37 = scmp.eq.s32.totalorder %s20, 1
      %p38 = por %p36, %p37
      %p39 = scmp.ne.s32.totalorder %s28, %s29
      %p40 = scmp.eq.s32.totalorder %s20, 0
      %p41 = por %p39, %p40
      %p42 = scmp.ne.s32.totalorder %s28, %s29
      %p43 = scmp.eq.s32.totalorder %s21, 1
      %p44 = por %p42, %p43
      %p46 = scmp.ne.s32.totalorder %s29, %s45
      %p47 = scmp.eq.s32.totalorder %s21, 0
      %p48 = por %p46, %p47
      %s49 = ssub.s32 %s15, %s22
      %p50 = scmp.eq.s32.totalorder %s49, 0
      %s52 = sadd.s32 %s51, 1
      %s53 = scalar_select %p50, %s51, %s52
      %p56 = pneg %p50
      %p57 = scmp.eq.s32.totalorder %s15, 1
      %p58 = por %p56, %p57
      %p59 = scmp.ne.s32.totalorder %s51, %s54
      %p60 = scmp.eq.s32.totalorder %s15, 0
      %p61 = por %p59, %p60
      %p62 = scmp.ne.s32.totalorder %s51, %s54
      %p63 = scmp.eq.s32.totalorder %s20, 1
      %p64 = por %p62, %p63
      %p65 = scmp.ne.s32.totalorder %s54, %s55
      %p66 = scmp.eq.s32.totalorder %s20, 0
      %p67 = por %p65, %p66
      %p68 = scmp.ne.s32.totalorder %s54, %s55
      %p69 = scmp.eq.s32.totalorder %s21, 1
      %p70 = por %p68, %p69
      %p72 = scmp.ne.s32.totalorder %s55, %s71
      %p73 = scmp.eq.s32.totalorder %s21, 0
      %p74 = por %p72, %p73
      %s76 = sadd.s32 %s75, 1
      %p79 = scmp.eq.s32.totalorder %s15, 1
      %p80 = scmp.ne.s32.totalorder %s75, %s77
      %p81 = scmp.eq.s32.totalorder %s15, 0
      %p82 = por %p80, %p81
      %p83 = scmp.ne.s32.totalorder %s75, %s77
      %p84 = scmp.eq.s32.totalorder %s20, 1
      %p85 = por %p83, %p84
      %p86 = scmp.ne.s32.totalorder %s77, %s78
      %p87 = scmp.eq.s32.totalorder %s20, 0
      %p88 = por %p86, %p87
      %p89 = scmp.ne.s32.totalorder %s77, %s78
      %p90 = scmp.eq.s32.totalorder %s21, 1
      %p91 = por %p89, %p90
      %p93 = scmp.ne.s32.totalorder %s78, %s92
      %p94 = scmp.eq.s32.totalorder %s21, 0
      %p95 = por %p93, %p94
      %s97 = sadd.s32 %s96, 1
      %p100 = scmp.eq.s32.totalorder %s15, 1
      %p101 = scmp.ne.s32.totalorder %s96, %s98
      %p102 = scmp.eq.s32.totalorder %s15, 0
      %p103 = por %p101, %p102
      %p104 = scmp.ne.s32.totalorder %s96, %s98
      %p105 = scmp.eq.s32.totalorder %s20, 1
      %p106 = por %p104, %p105
      %p107 = scmp.ne.s32.totalorder %s98, %s99
      %p108 = scmp.eq.s32.totalorder %s20, 0
      %p109 = por %p107, %p108
      %p110 = scmp.ne.s32.totalorder %s98, %s99
      %p111 = scmp.eq.s32.totalorder %s21, 1
      %p112 = por %p110, %p111
      %p114 = scmp.ne.s32.totalorder %s99, %s113
      %p115 = scmp.eq.s32.totalorder %s21, 0
      %p116 = por %p114, %p115
      %s118 = sadd.s32 %s117, 1
      %p121 = scmp.eq.s32.totalorder %s15, 1
      %p122 = scmp.ne.s32.totalorder %s117, %s119
      %p123 = scmp.eq.s32.totalorder %s15, 0
      %p124 = por %p122, %p123
      %p125 = scmp.ne.s32.totalorder %s117, %s119
      %p126 = scmp.eq.s32.totalorder %s20, 1
      %p127 = por %p125, %p126
      %p128 = scmp.ne.s32.totalorder %s119, %s120
      %p129 = scmp.eq.s32.totalorder %s20, 0
      %p130 = por %p128, %p129
      %p131 = scmp.ne.s32.totalorder %s119, %s120
      %p132 = scmp.eq.s32.totalorder %s21, 1
      %p133 = por %p131, %p132
      %p135 = scmp.ne.s32.totalorder %s120, %s134
      %p136 = scmp.eq.s32.totalorder %s21, 0
      %p137 = por %p135, %p136
      %s139 = sadd.s32 %s138, 1
      %p142 = scmp.eq.s32.totalorder %s15, 1
      %p143 = scmp.ne.s32.totalorder %s138, %s140
      %p144 = scmp.eq.s32.totalorder %s15, 0
      %p145 = por %p143, %p144
      %p146 = scmp.ne.s32.totalorder %s138, %s140
      %p147 = scmp.eq.s32.totalorder %s20, 1
      %p148 = por %p146, %p147
      %p149 = scmp.ne.s32.totalorder %s140, %s141
      %p150 = scmp.eq.s32.totalorder %s20, 0
      %p151 = por %p149, %p150
      %p152 = scmp.ne.s32.totalorder %s140, %s141
      %p153 = scmp.eq.s32.totalorder %s21, 1
      %p154 = por %p152, %p153
      %p156 = scmp.ne.s32.totalorder %s141, %s155
      %p157 = scmp.eq.s32.totalorder %s21, 0
      %p158 = por %p156, %p157
      %s160 = sadd.s32 %s159, 1
      %p163 = scmp.eq.s32.totalorder %s15, 1
      %p164 = scmp.ne.s32.totalorder %s159, %s161
      %p165 = scmp.eq.s32.totalorder %s15, 0
      %p166 = por %p164, %p165
      %p167 = scmp.ne.s32.totalorder %s159, %s161
      %p168 = scmp.eq.s32.totalorder %s20, 1
      %p169 = por %p167, %p168
      %p170 = scmp.ne.s32.totalorder %s161, %s162
      %p171 = scmp.eq.s32.totalorder %s20, 0
      %p172 = por %p170, %p171
      %p173 = scmp.ne.s32.totalorder %s161, %s162
      %p174 = scmp.eq.s32.totalorder %s21, 1
      %p175 = por %p173, %p174
      %p177 = scmp.ne.s32.totalorder %s162, %s176
      %p178 = scmp.eq.s32.totalorder %s21, 0
      %p179 = por %p177, %p178
      %s180 = ssub.s32 %s15, %s22
      %p181 = scmp.eq.s32.totalorder %s180, 0
      %s183 = sadd.s32 %s182, 1
      %s184 = scalar_select %p181, %s182, %s183
      %p187 = pneg %p181
      %p188 = scmp.eq.s32.totalorder %s15, 1
      %p189 = por %p187, %p188
      %p190 = scmp.ne.s32.totalorder %s182, %s185
      %p191 = scmp.eq.s32.totalorder %s15, 0
      %p192 = por %p190, %p191
      %p193 = scmp.ne.s32.totalorder %s182, %s185
      %p194 = scmp.eq.s32.totalorder %s20, 1
      %p195 = por %p193, %p194
      %p196 = scmp.ne.s32.totalorder %s185, %s186
      %p197 = scmp.eq.s32.totalorder %s20, 0
      %p198 = por %p196, %p197
      %p199 = scmp.ne.s32.totalorder %s185, %s186
      %p200 = scmp.eq.s32.totalorder %s21, 1
      %p201 = por %p199, %p200
      %p203 = scmp.ne.s32.totalorder %s186, %s202
      %p204 = scmp.eq.s32.totalorder %s21, 0
      %p205 = por %p203, %p204
      %p206 = scmp.le.s32.totalorder 1, %s15
      %p207 = scmp.lt.s32.totalorder %s15, 3
      %p208 = pnand %p206, %p207
      %p209 = pneg %p208
      // Predicated region
      $region9: #{gcn_forward.1} parent=5 // pred_check
        _
      $region10: #{gcn_forward.1} parent=5 // pred_check_branch
        %211 = sbr.rel (%p208) target = $region12
      $region11: #{gcn_forward.1} parent=5 // pred_region
        %s212 = ssub.s32 %s15, 1
        // Predicated region
        $region13: #{gcn_forward.1} parent=11 // pred_check
          %p213 = pneg %p88
        $region14: #{gcn_forward.1} parent=11 // pred_check_branch
          %215 = sbr.rel (%p213) target = $region16
        $region15: #{gcn_forward.1} parent=11 // pred_region
          _
        $region16: #{gcn_forward.1} parent=11 // pred_fallthru
          _
        // Predicated region
        $region17: #{gcn_forward.1} parent=11 // pred_check
          %p216 = pneg %p109
        $region18: #{gcn_forward.1} parent=11 // pred_check_branch
          %218 = sbr.rel (%p216) target = $region20
        $region19: #{gcn_forward.1} parent=11 // pred_region
          %s220 = ssub.s32 4096, 4096
          %221 = vsyncadd [#allocation3], %s220
          %s222 = sshll.u32 [#allocation2], 4
          %s223 = int_to_ptr.vmem [resolvable:$true] %s222
          %228 = dma.hbm_to_vmem [thread:$0]  %s3, 4096, %s223, [#allocation3], 64, 64, 4
        $region20: #{gcn_forward.1} parent=11 // pred_fallthru
          _
        // Predicated region
        $region21: #{gcn_forward.1} parent=11 // pred_check
          %p229 = pneg %p130
        $region22: #{gcn_forward.1} parent=11 // pred_check_branch
          %231 = sbr.rel (%p229) target = $region24
        $region23: #{gcn_forward.1} parent=11 // pred_region
          %s233 = ssub.s32 1024, 1024
          %234 = vsyncadd [#allocation5], %s233
          %s235 = sshll.u32 [#allocation4], 4
          %s236 = int_to_ptr.vmem [resolvable:$true] %s235
          %241 = dma.hbm_to_vmem [thread:$0]  %s4, 1024, %s236, [#allocation5], 64, 64, 4
        $region24: #{gcn_forward.1} parent=11 // pred_fallthru
          _
        // Predicated region
        $region25: #{gcn_forward.1} parent=11 // pred_check
          %p242 = pneg %p151
        $region26: #{gcn_forward.1} parent=11 // pred_check_branch
          %244 = sbr.rel (%p242) target = $region28
        $region27: #{gcn_forward.1} parent=11 // pred_region
          %s246 = ssub.s32 1024, 1024
          %247 = vsyncadd [#allocation5], %s246
          %s248 = sshll.u32 [#allocation6], 4
          %s249 = int_to_ptr.vmem [resolvable:$true] %s248
          %254 = dma.hbm_to_vmem [thread:$0]  %s5, 1024, %s249, [#allocation5], 64, 64, 4
        $region28: #{gcn_forward.1} parent=11 // pred_fallthru
          _
        // Predicated region
        $region29: #{gcn_forward.1} parent=11 // pred_check
          %p255 = pneg %p172
        $region30: #{gcn_forward.1} parent=11 // pred_check_branch
          %257 = sbr.rel (%p255) target = $region32
        $region31: #{gcn_forward.1} parent=11 // pred_region
          _
        $region32: #{gcn_forward.1} parent=11 // pred_fallthru
          _
      $region12: #{gcn_forward.1} parent=5 // pred_fallthru
        _
      %p258 = scmp.lt.s32.totalorder %s15, 2
      // Predicated region
      $region33: #{gcn_forward.1} parent=5 // pred_check
        %p259 = pneg %p258
      $region34: #{gcn_forward.1} parent=5 // pred_check_branch
        %261 = sbr.rel (%p259) target = $region36
      $region35: #{gcn_forward.1} parent=5 // pred_region
        // Predicated region
        $region37: #{gcn_forward.1} parent=35 // pred_check
          %p262 = pneg %p35
        $region38: #{gcn_forward.1} parent=35 // pred_check_branch
          %264 = sbr.rel (%p262) target = $region40
        $region39: #{gcn_forward.1} parent=35 // pred_region
          %p265 = scmp.lt.s32.totalorder %s15, 1
          %s266 = scalar_select %p265, %s15, 1
          %s267 = smul.addr %s266, 16
          %s268 = smul.addr %s267, 4
          %s269 = scalar_lea.vmem %s0, %s268
        $region40: #{gcn_forward.1} parent=35 // pred_fallthru
          _
        // Predicated region
        $region41: #{gcn_forward.1} parent=35 // pred_check
          %p270 = pneg %p61
        $region42: #{gcn_forward.1} parent=35 // pred_check_branch
          %272 = sbr.rel (%p270) target = $region44
        $region43: #{gcn_forward.1} parent=35 // pred_region
          %p273 = scmp.lt.s32.totalorder %s15, 1
          %s274 = scalar_select %p273, %s15, 1
          %s275 = smul.addr %s274, 16
          %s276 = smul.addr %s275, 4
          %s277 = scalar_lea.vmem %s1, %s276
        $region44: #{gcn_forward.1} parent=35 // pred_fallthru
          _
      $region36: #{gcn_forward.1} parent=5 // pred_fallthru
        _
      %p278 = scmp.le.s32.totalorder 1, %s15
      %p279 = scmp.lt.s32.totalorder %s15, 3
      %p280 = pnand %p278, %p279
      %p281 = pneg %p280
      // Predicated region
      $region45: #{gcn_forward.1} parent=5 // pred_check
        _
      $region46: #{gcn_forward.1} parent=5 // pred_check_branch
        %283 = sbr.rel (%p280) target = $region48
      $region47: #{gcn_forward.1} parent=5 // pred_region
        %s284 = ssub.s32 %s15, 1
        // Predicated region
        $region49: #{gcn_forward.1} parent=47 // pred_check
          %p285 = pneg %p109
        $region50: #{gcn_forward.1} parent=47 // pred_check_branch
          %287 = sbr.rel (%p285) target = $region52
        $region51: #{gcn_forward.1} parent=47 // pred_region
          %288 = dma.done [#allocation3], 4096
        $region52: #{gcn_forward.1} parent=47 // pred_fallthru
          _
        // Predicated region
        $region53: #{gcn_forward.1} parent=47 // pred_check
          %p289 = pneg %p130
        $region54: #{gcn_forward.1} parent=47 // pred_check_branch
          %291 = sbr.rel (%p289) target = $region56
        $region55: #{gcn_forward.1} parent=47 // pred_region
          %292 = dma.done [#allocation5], 1024
        $region56: #{gcn_forward.1} parent=47 // pred_fallthru
          _
        // Predicated region
        $region57: #{gcn_forward.1} parent=47 // pred_check
          %p293 = pneg %p151
        $region58: #{gcn_forward.1} parent=47 // pred_check_branch
          %295 = sbr.rel (%p293) target = $region60
        $region59: #{gcn_forward.1} parent=47 // pred_region
          %296 = dma.done [#allocation5], 1024
        $region60: #{gcn_forward.1} parent=47 // pred_fallthru
          _
        %p297 = scmp.lt.s32.totalorder %s20, 1
        %s298 = scalar_select %p297, %s20, 1
        %s299 = smul.addr %s298, 16
        %s300 = smul.addr %s299, 4
        %s301 = scalar_lea.vmem %s0, %s300
        %p302 = pneg %p41
        %p303 = pneg %p38
        %p304 = scmp.lt.s32.totalorder %s20, 1
        %s305 = scalar_select %p304, %s20, 1
        %s306 = smul.addr %s305, 16
        %s307 = smul.addr %s306, 4
        %s308 = scalar_lea.vmem %s1, %s307
        %p309 = pneg %p67
        %p310 = pneg %p64
        %p311 = pneg %p88
        %p312 = pneg %p85
        %p313 = pneg %p109
        %p314 = pneg %p106
        %p315 = pneg %p130
        %p316 = pneg %p127
        %p317 = pneg %p151
        %p318 = pneg %p148
        %p319 = pneg %p172
        %p320 = pneg %p169
        %p321 = pneg %p198
        %p322 = pneg %p195
        %p323 = scmp.lt.s32.totalorder %s20, 1
        %s324 = scalar_select %p323, %s20, 1
        %s325 = smul.addr %s324, 16
        %s326 = smul.addr %s325, 8
        %s327 = scalar_lea.vmem %s7, %s326
        %p328 = scmp.lt.s32.totalorder %s20, 1
        %s329 = scalar_select %p328, %s20, 1
        %s330 = smul.addr %s329, 16
        %s331 = smul.addr %s330, 4
        %s332 = scalar_lea.vmem %s0, %s331
        %p333 = scmp.lt.s32.totalorder %s20, 1
        %s334 = scalar_select %p333, %s20, 1
        %s335 = smul.addr %s334, 16
        %s336 = smul.addr %s335, 4
        %s337 = scalar_lea.vmem %s1, %s336
        %p338 = scmp.lt.s32.totalorder %s20, 1
        %s339 = scalar_select %p338, %s20, 1
        %s340 = smul.addr %s339, 16
        %s341 = smul.addr %s340, 8
        %s342 = scalar_lea.vmem %s7, %s341
        %v344 = vld [vmem:[%s332] sm:$0xf]
        %v345 = vld [vmem:[%s332 + $0x4] sm:$0xf]
        %v346 = vld [vmem:[%s332 + $0x8] sm:$0xf]
        %v347 = vld [vmem:[%s332 + $0xc] sm:$0xf]
        %v348 = vld [vmem:[%s332 + $0x10] sm:$0xf]
        %v349 = vld [vmem:[%s332 + $0x14] sm:$0xf]
        %v350 = vld [vmem:[%s332 + $0x18] sm:$0xf]
        %v351 = vld [vmem:[%s332 + $0x1c] sm:$0xf]
        %v352 = vld [vmem:[%s332 + $0x20] sm:$0xf]
        %v353 = vld [vmem:[%s332 + $0x24] sm:$0xf]
        %v354 = vld [vmem:[%s332 + $0x28] sm:$0xf]
        %v355 = vld [vmem:[%s332 + $0x2c] sm:$0xf]
        %v356 = vld [vmem:[%s332 + $0x30] sm:$0xf]
        %v357 = vld [vmem:[%s332 + $0x34] sm:$0xf]
        %v358 = vld [vmem:[%s332 + $0x38] sm:$0xf]
        %v359 = vld [vmem:[%s332 + $0x3c] sm:$0xf]
        %v360 = vld [vmem:[%s337] sm:$0xf]
        %v361 = vld [vmem:[%s337 + $0x4] sm:$0xf]
        %v362 = vld [vmem:[%s337 + $0x8] sm:$0xf]
        %v363 = vld [vmem:[%s337 + $0xc] sm:$0xf]
        %v364 = vld [vmem:[%s337 + $0x10] sm:$0xf]
        %v365 = vld [vmem:[%s337 + $0x14] sm:$0xf]
        %v366 = vld [vmem:[%s337 + $0x18] sm:$0xf]
        %v367 = vld [vmem:[%s337 + $0x1c] sm:$0xf]
        %v368 = vld [vmem:[%s337 + $0x20] sm:$0xf]
        %v369 = vld [vmem:[%s337 + $0x24] sm:$0xf]
        %v370 = vld [vmem:[%s337 + $0x28] sm:$0xf]
        %v371 = vld [vmem:[%s337 + $0x2c] sm:$0xf]
        %v372 = vld [vmem:[%s337 + $0x30] sm:$0xf]
        %v373 = vld [vmem:[%s337 + $0x34] sm:$0xf]
        %v374 = vld [vmem:[%s337 + $0x38] sm:$0xf]
        %v375 = vld [vmem:[%s337 + $0x3c] sm:$0xf]
        %v392 = vunpack.c.l.b16 %v344
        %v393 = vunpack.c.l.b16 %v345
        %v394 = vunpack.c.l.b16 %v346
        %v395 = vunpack.c.l.b16 %v347
        %v396 = vunpack.c.l.b16 %v348
        %v397 = vunpack.c.l.b16 %v349
        %v398 = vunpack.c.l.b16 %v350
        %v399 = vunpack.c.l.b16 %v351
        %v400 = vunpack.c.l.b16 %v352
        %v401 = vunpack.c.l.b16 %v353
        %v402 = vunpack.c.l.b16 %v354
        %v403 = vunpack.c.l.b16 %v355
        %v404 = vunpack.c.l.b16 %v356
        %v405 = vunpack.c.l.b16 %v357
        %v406 = vunpack.c.l.b16 %v358
        %v407 = vunpack.c.l.b16 %v359
        %v408 = vpack.c.b16 %v393, %v392
        %v409 = vpack.c.b16 %v395, %v394
        %v410 = vpack.c.b16 %v397, %v396
        %v411 = vpack.c.b16 %v399, %v398
        %v412 = vpack.c.b16 %v401, %v400
        %v413 = vpack.c.b16 %v403, %v402
        %v414 = vpack.c.b16 %v405, %v404
        %v415 = vpack.c.b16 %v407, %v406
        %v440 = vunpack.c.l.b16 %v360
        %v441 = vunpack.c.l.b16 %v361
        %v442 = vunpack.c.l.b16 %v362
        %v443 = vunpack.c.l.b16 %v363
        %v444 = vunpack.c.l.b16 %v364
        %v445 = vunpack.c.l.b16 %v365
        %v446 = vunpack.c.l.b16 %v366
        %v447 = vunpack.c.l.b16 %v367
        %v448 = vunpack.c.l.b16 %v368
        %v449 = vunpack.c.l.b16 %v369
        %v450 = vunpack.c.l.b16 %v370
        %v451 = vunpack.c.l.b16 %v371
        %v452 = vunpack.c.l.b16 %v372
        %v453 = vunpack.c.l.b16 %v373
        %v454 = vunpack.c.l.b16 %v374
        %v455 = vunpack.c.l.b16 %v375
        %v456 = vpack.c.b16 %v441, %v440
        %v457 = vpack.c.b16 %v443, %v442
        %v458 = vpack.c.b16 %v445, %v444
        %v459 = vpack.c.b16 %v447, %v446
        %v460 = vpack.c.b16 %v449, %v448
        %v461 = vpack.c.b16 %v451, %v450
        %v462 = vpack.c.b16 %v453, %v452
        %v463 = vpack.c.b16 %v455, %v454
        %472 = vmatprep.subr.bf16.mxu0 0
        %473 = vmatpush1.bf16.msra.mxu0 %v456
        %474 = vmatprep.subr.bf16.mxu0 0
        %475 = vmatpush1.bf16.msra.mxu0 %v457
        %476 = vmatprep.subr.bf16.mxu0 0
        %477 = vmatpush1.bf16.msra.mxu0 %v458
        %478 = vmatprep.subr.bf16.mxu0 0
        %479 = vmatpush1.bf16.msra.mxu0 %v459
        %480 = vmatprep.subr.bf16.mxu0 0
        %481 = vmatpush1.bf16.msra.mxu0 %v460
        %482 = vmatprep.subr.bf16.mxu0 0
        %483 = vmatpush1.bf16.msra.mxu0 %v461
        %484 = vmatprep.subr.bf16.mxu0 0
        %485 = vmatpush1.bf16.msra.mxu0 %v462
        %486 = vmatprep.subr.bf16.mxu0 0
        %487 = vmatpush1.bf16.msra.mxu0 %v463
        %488 = vmatprep.subr.bf16.mxu0 0
        %489 = vmatpush1.bf16.msra.mxu0 0
        %490 = vmatprep.subr.bf16.mxu0 0
        %491 = vmatpush1.bf16.msra.mxu0 0
        %492 = vmatprep.subr.bf16.mxu0 0
        %493 = vmatpush1.bf16.msra.mxu0 0
        %494 = vmatprep.subr.bf16.mxu0 0
        %495 = vmatpush1.bf16.msra.mxu0 0
        %496 = vmatprep.subr.bf16.mxu0 0
        %497 = vmatpush1.bf16.msra.mxu0 0
        %498 = vmatprep.subr.bf16.mxu0 0
        %499 = vmatpush1.bf16.msra.mxu0 0
        %500 = vmatprep.subr.bf16.mxu0 0
        %501 = vmatpush1.bf16.msra.mxu0 0
        %502 = vmatprep.subr.bf16.mxu0 0
        %503 = vmatpush1.bf16.msra.mxu0 0
        %504 = vmatprep.mubr.bf16.mxu0 0
        %505 = vmatmul.mubr.bf16.gmra.mrb[0].mxu0 %v408
        %v506 = vpop.f32.mrb[0].mxu0
        %v507 = vadd.f32 0.0, %v506
        %v508 = vpop.f32.mrb[0].mxu0
        %v509 = vpop.f32.mrb[0].mxu0
        %v510 = vadd.f32 0.0, %v509
        %v511 = vpop.f32.mrb[0].mxu0
        %512 = vmatprep.mubr.bf16.mxu0 0
        %513 = vmatmul.mubr.bf16.gmra.mrb[0].mxu0 %v409
        %v514 = vpop.f32.mrb[0].mxu0
        %v515 = vadd.f32 0.0, %v514
        %v516 = vpop.f32.mrb[0].mxu0
        %v517 = vpop.f32.mrb[0].mxu0
        %v518 = vadd.f32 0.0, %v517
        %v519 = vpop.f32.mrb[0].mxu0
        %520 = vmatprep.mubr.bf16.mxu0 0
        %521 = vmatmul.mubr.bf16.gmra.mrb[0].mxu0 %v410
        %v522 = vpop.f32.mrb[0].mxu0
        %v523 = vadd.f32 0.0, %v522
        %v524 = vpop.f32.mrb[0].mxu0
        %v525 = vpop.f32.mrb[0].mxu0
        %v526 = vadd.f32 0.0, %v525
        %v527 = vpop.f32.mrb[0].mxu0
        %528 = vmatprep.mubr.bf16.mxu0 0
        %529 = vmatmul.mubr.bf16.gmra.mrb[0].mxu0 %v411
        %v530 = vpop.f32.mrb[0].mxu0
        %v531 = vadd.f32 0.0, %v530
        %v532 = vpop.f32.mrb[0].mxu0
        %v533 = vpop.f32.mrb[0].mxu0
        %v534 = vadd.f32 0.0, %v533
        %v535 = vpop.f32.mrb[0].mxu0
        %536 = vmatprep.mubr.bf16.mxu0 0
        %537 = vmatmul.mubr.bf16.gmra.mrb[0].mxu0 %v412
        %v538 = vpop.f32.mrb[0].mxu0
        %v539 = vadd.f32 0.0, %v538
        %v540 = vpop.f32.mrb[0].mxu0
        %v541 = vpop.f32.mrb[0].mxu0
        %v542 = vadd.f32 0.0, %v541
        %v543 = vpop.f32.mrb[0].mxu0
        %544 = vmatprep.mubr.bf16.mxu0 0
        %545 = vmatmul.mubr.bf16.gmra.mrb[0].mxu0 %v413
        %v546 = vpop.f32.mrb[0].mxu0
        %v547 = vadd.f32 0.0, %v546
        %v548 = vpop.f32.mrb[0].mxu0
        %v549 = vpop.f32.mrb[0].mxu0
        %v550 = vadd.f32 0.0, %v549
        %v551 = vpop.f32.mrb[0].mxu0
        %552 = vmatprep.mubr.bf16.mxu0 0
        %553 = vmatmul.mubr.bf16.gmra.mrb[0].mxu0 %v414
        %v554 = vpop.f32.mrb[0].mxu0
        %v555 = vadd.f32 0.0, %v554
        %v556 = vpop.f32.mrb[0].mxu0
        %v557 = vpop.f32.mrb[0].mxu0
        %v558 = vadd.f32 0.0, %v557
        %v559 = vpop.f32.mrb[0].mxu0
        %560 = vmatprep.mubr.bf16.mxu0 0
        %561 = vmatmul.mubr.bf16.gmra.mrb[0].mxu0 %v415
        %v562 = vpop.f32.mrb[0].mxu0
        %v563 = vadd.f32 0.0, %v562
        %v564 = vpop.f32.mrb[0].mxu0
        %v565 = vpop.f32.mrb[0].mxu0
        %v566 = vadd.f32 0.0, %v565
        %v567 = vpop.f32.mrb[0].mxu0
        %568 = vdwg.mxu0
        %v569 = vpack.c.bf16 %v510, %v507
        %v570 = vpack.c.bf16 %v518, %v515
        %v571 = vpack.c.bf16 %v526, %v523
        %v572 = vpack.c.bf16 %v534, %v531
        %v573 = vpack.c.bf16 %v542, %v539
        %v574 = vpack.c.bf16 %v550, %v547
        %v575 = vpack.c.bf16 %v558, %v555
        %v576 = vpack.c.bf16 %v566, %v563
        %v577 = vld [vmem:[%s2] sm:$0xff]
        %v578 = vld [vmem:[%s2 + $0x8] sm:$0xff]
        %v579 = vld [vmem:[%s2 + $0x10] sm:$0xff]
        %v580 = vld [vmem:[%s2 + $0x18] sm:$0xff]
        %v581 = vld [vmem:[%s2 + $0x20] sm:$0xff]
        %v582 = vld [vmem:[%s2 + $0x28] sm:$0xff]
        %v583 = vld [vmem:[%s2 + $0x30] sm:$0xff]
        %v584 = vld [vmem:[%s2 + $0x38] sm:$0xff]
        %v585 = vld [vmem:[%s2 + $0x40] sm:$0xff]
        %v586 = vld [vmem:[%s2 + $0x48] sm:$0xff]
        %v587 = vld [vmem:[%s2 + $0x50] sm:$0xff]
        %v588 = vld [vmem:[%s2 + $0x58] sm:$0xff]
        %v589 = vld [vmem:[%s2 + $0x60] sm:$0xff]
        %v590 = vld [vmem:[%s2 + $0x68] sm:$0xff]
        %v591 = vld [vmem:[%s2 + $0x70] sm:$0xff]
        %v592 = vld [vmem:[%s2 + $0x78] sm:$0xff]
        %v593 = vld [vmem:[%s2 + $0x80] sm:$0xff]
        %v594 = vld [vmem:[%s2 + $0x88] sm:$0xff]
        %v595 = vld [vmem:[%s2 + $0x90] sm:$0xff]
        %v596 = vld [vmem:[%s2 + $0x98] sm:$0xff]
        %v597 = vld [vmem:[%s2 + $0xa0] sm:$0xff]
        %v598 = vld [vmem:[%s2 + $0xa8] sm:$0xff]
        %v599 = vld [vmem:[%s2 + $0xb0] sm:$0xff]
        %v600 = vld [vmem:[%s2 + $0xb8] sm:$0xff]
        %v601 = vld [vmem:[%s2 + $0xc0] sm:$0xff]
        %v602 = vld [vmem:[%s2 + $0xc8] sm:$0xff]
        %v603 = vld [vmem:[%s2 + $0xd0] sm:$0xff]
        %v604 = vld [vmem:[%s2 + $0xd8] sm:$0xff]
        %v605 = vld [vmem:[%s2 + $0xe0] sm:$0xff]
        %v606 = vld [vmem:[%s2 + $0xe8] sm:$0xff]
        %v607 = vld [vmem:[%s2 + $0xf0] sm:$0xff]
        %v608 = vld [vmem:[%s2 + $0xf8] sm:$0xff]
        %v609 = vld [vmem:[%s6] sm:$0xf]
        %v611 = vlaneseq
        %v612 = vshrl.u32 %v611, 7
        %v613 = vsub.s32 0, %v612
        %v614 = vrot.slane %v609, %v613
        %v615 = vlaneseq
        %v616 = vshrl.u32 %v615, 7
        %v617 = vsub.s32 1, %v616
        %v618 = vrot.slane %v609, %v617
        %v619 = vlaneseq
        %v620 = vshrl.u32 %v619, 7
        %v621 = vsub.s32 2, %v620
        %v622 = vrot.slane %v609, %v621
        %v623 = vlaneseq
        %v624 = vshrl.u32 %v623, 7
        %v625 = vsub.s32 3, %v624
        %v626 = vrot.slane %v609, %v625
        %v663 = vunpack.c.l.b16 %v577
        %v664 = vunpack.c.h.b16 %v577
        %v665 = vunpack.c.l.b16 %v578
        %v666 = vunpack.c.h.b16 %v578
        %v667 = vunpack.c.l.b16 %v579
        %v668 = vunpack.c.h.b16 %v579
        %v669 = vunpack.c.l.b16 %v580
        %v670 = vunpack.c.h.b16 %v580
        %v671 = vunpack.c.l.b16 %v581
        %v672 = vunpack.c.h.b16 %v581
        %v673 = vunpack.c.l.b16 %v582
        %v674 = vunpack.c.h.b16 %v582
        %v675 = vunpack.c.l.b16 %v583
        %v676 = vunpack.c.h.b16 %v583
        %v677 = vunpack.c.l.b16 %v584
        %v678 = vunpack.c.h.b16 %v584
        %v679 = vunpack.c.l.b16 %v585
        %v680 = vunpack.c.h.b16 %v585
        %v681 = vunpack.c.l.b16 %v586
        %v682 = vunpack.c.h.b16 %v586
        %v683 = vunpack.c.l.b16 %v587
        %v684 = vunpack.c.h.b16 %v587
        %v685 = vunpack.c.l.b16 %v588
        %v686 = vunpack.c.h.b16 %v588
        %v687 = vunpack.c.l.b16 %v589
        %v688 = vunpack.c.h.b16 %v589
        %v689 = vunpack.c.l.b16 %v590
        %v690 = vunpack.c.h.b16 %v590
        %v691 = vunpack.c.l.b16 %v591
        %v692 = vunpack.c.h.b16 %v591
        %v693 = vunpack.c.l.b16 %v592
        %v694 = vunpack.c.h.b16 %v592
        %v695 = vunpack.c.l.b16 %v593
        %v696 = vunpack.c.h.b16 %v593
        %v697 = vunpack.c.l.b16 %v594
        %v698 = vunpack.c.h.b16 %v594
        %v699 = vunpack.c.l.b16 %v595
        %v700 = vunpack.c.h.b16 %v595
        %v701 = vunpack.c.l.b16 %v596
        %v702 = vunpack.c.h.b16 %v596
        %v703 = vunpack.c.l.b16 %v597
        %v704 = vunpack.c.h.b16 %v597
        %v705 = vunpack.c.l.b16 %v598
        %v706 = vunpack.c.h.b16 %v598
        %v707 = vunpack.c.l.b16 %v599
        %v708 = vunpack.c.h.b16 %v599
        %v709 = vunpack.c.l.b16 %v600
        %v710 = vunpack.c.h.b16 %v600
        %v711 = vunpack.c.l.b16 %v601
        %v712 = vunpack.c.h.b16 %v601
        %v713 = vunpack.c.l.b16 %v602
        %v714 = vunpack.c.h.b16 %v602
        %v715 = vunpack.c.l.b16 %v603
        %v716 = vunpack.c.h.b16 %v603
        %v717 = vunpack.c.l.b16 %v604
        %v718 = vunpack.c.h.b16 %v604
        %v719 = vunpack.c.l.b16 %v605
        %v720 = vunpack.c.h.b16 %v605
        %v721 = vunpack.c.l.b16 %v606
        %v722 = vunpack.c.h.b16 %v606
        %v723 = vunpack.c.l.b16 %v607
        %v724 = vunpack.c.h.b16 %v607
        %v725 = vunpack.c.l.b16 %v608
        %v726 = vunpack.c.h.b16 %v608
        %v727 = vpack.c.b16 %v667, %v663
        %v728 = vpack.c.b16 %v668, %v664
        %v729 = vpack.c.b16 %v669, %v665
        %v730 = vpack.c.b16 %v670, %v666
        %v731 = vpack.c.b16 %v675, %v671
        %v732 = vpack.c.b16 %v676, %v672
        %v733 = vpack.c.b16 %v677, %v673
        %v734 = vpack.c.b16 %v678, %v674
        %v735 = vpack.c.b16 %v683, %v679
        %v736 = vpack.c.b16 %v684, %v680
        %v737 = vpack.c.b16 %v685, %v681
        %v738 = vpack.c.b16 %v686, %v682
        %v739 = vpack.c.b16 %v691, %v687
        %v740 = vpack.c.b16 %v692, %v688
        %v741 = vpack.c.b16 %v693, %v689
        %v742 = vpack.c.b16 %v694, %v690
        %v743 = vpack.c.b16 %v699, %v695
        %v744 = vpack.c.b16 %v700, %v696
        %v745 = vpack.c.b16 %v701, %v697
        %v746 = vpack.c.b16 %v702, %v698
        %v747 = vpack.c.b16 %v707, %v703
        %v748 = vpack.c.b16 %v708, %v704
        %v749 = vpack.c.b16 %v709, %v705
        %v750 = vpack.c.b16 %v710, %v706
        %v751 = vpack.c.b16 %v715, %v711
        %v752 = vpack.c.b16 %v716, %v712
        %v753 = vpack.c.b16 %v717, %v713
        %v754 = vpack.c.b16 %v718, %v714
        %v755 = vpack.c.b16 %v723, %v719
        %v756 = vpack.c.b16 %v724, %v720
        %v757 = vpack.c.b16 %v725, %v721
        %v758 = vpack.c.b16 %v726, %v722
        %791 = vmatprep.subr.bf16.mxu0 %v728
        %792 = vmatpush1.bf16.msra.mxu0 %v727
        %793 = vmatprep.subr.bf16.mxu0 %v732
        %794 = vmatpush1.bf16.msra.mxu0 %v731
        %795 = vmatprep.subr.bf16.mxu0 %v736
        %796 = vmatpush1.bf16.msra.mxu0 %v735
        %797 = vmatprep.subr.bf16.mxu0 %v740
        %798 = vmatpush1.bf16.msra.mxu0 %v739
        %799 = vmatprep.subr.bf16.mxu0 %v744
        %800 = vmatpush1.bf16.msra.mxu0 %v743
        %801 = vmatprep.subr.bf16.mxu0 %v748
        %802 = vmatpush1.bf16.msra.mxu0 %v747
        %803 = vmatprep.subr.bf16.mxu0 %v752
        %804 = vmatpush1.bf16.msra.mxu0 %v751
        %805 = vmatprep.subr.bf16.mxu0 %v756
        %806 = vmatpush1.bf16.msra.mxu0 %v755
        %807 = vmatprep.subr.bf16.mxu0 0
        %808 = vmatpush1.bf16.msra.mxu0 0
        %809 = vmatprep.subr.bf16.mxu0 0
        %810 = vmatpush1.bf16.msra.mxu0 0
        %811 = vmatprep.subr.bf16.mxu0 0
        %812 = vmatpush1.bf16.msra.mxu0 0
        %813 = vmatprep.subr.bf16.mxu0 0
        %814 = vmatpush1.bf16.msra.mxu0 0
        %815 = vmatprep.subr.bf16.mxu0 0
        %816 = vmatpush1.bf16.msra.mxu0 0
        %817 = vmatprep.subr.bf16.mxu0 0
        %818 = vmatpush1.bf16.msra.mxu0 0
        %819 = vmatprep.subr.bf16.mxu0 0
        %820 = vmatpush1.bf16.msra.mxu0 0
        %821 = vmatprep.subr.bf16.mxu0 0
        %822 = vmatpush1.bf16.msra.mxu0 0
        %823 = vmatprep.mubr.bf16.mxu0 0
        %824 = vmatmul.mubr.bf16.gmra.mrb[0].mxu0 %v569
        %v825 = vpop.f32.mrb[0].mxu0
        %v826 = vadd.f32 %v614, %v825
        %v827 = vpop.f32.mrb[0].mxu0
        %v828 = vadd.f32 %v618, %v827
        %v829 = vpop.f32.mrb[0].mxu0
        %v830 = vadd.f32 %v614, %v829
        %v831 = vpop.f32.mrb[0].mxu0
        %v832 = vadd.f32 %v618, %v831
        %833 = vmatprep.mubr.bf16.mxu0 0
        %834 = vmatmul.mubr.bf16.gmra.mrb[0].mxu0 %v570
        %v835 = vpop.f32.mrb[0].mxu0
        %v836 = vadd.f32 %v614, %v835
        %v837 = vpop.f32.mrb[0].mxu0
        %v838 = vadd.f32 %v618, %v837
        %v839 = vpop.f32.mrb[0].mxu0
        %v840 = vadd.f32 %v614, %v839
        %v841 = vpop.f32.mrb[0].mxu0
        %v842 = vadd.f32 %v618, %v841
        %843 = vmatprep.mubr.bf16.mxu0 0
        %844 = vmatmul.mubr.bf16.gmra.mrb[0].mxu0 %v571
        %v845 = vpop.f32.mrb[0].mxu0
        %v846 = vadd.f32 %v614, %v845
        %v847 = vpop.f32.mrb[0].mxu0
        %v848 = vadd.f32 %v618, %v847
        %v849 = vpop.f32.mrb[0].mxu0
        %v850 = vadd.f32 %v614, %v849
        %v851 = vpop.f32.mrb[0].mxu0
        %v852 = vadd.f32 %v618, %v851
        %853 = vmatprep.mubr.bf16.mxu0 0
        %854 = vmatmul.mubr.bf16.gmra.mrb[0].mxu0 %v572
        %v855 = vpop.f32.mrb[0].mxu0
        %v856 = vadd.f32 %v614, %v855
        %v857 = vpop.f32.mrb[0].mxu0
        %v858 = vadd.f32 %v618, %v857
        %v859 = vpop.f32.mrb[0].mxu0
        %v860 = vadd.f32 %v614, %v859
        %v861 = vpop.f32.mrb[0].mxu0
        %v862 = vadd.f32 %v618, %v861
        %863 = vmatprep.mubr.bf16.mxu0 0
        %864 = vmatmul.mubr.bf16.gmra.mrb[0].mxu0 %v573
        %v865 = vpop.f32.mrb[0].mxu0
        %v866 = vadd.f32 %v614, %v865
        %v867 = vpop.f32.mrb[0].mxu0
        %v868 = vadd.f32 %v618, %v867
        %v869 = vpop.f32.mrb[0].mxu0
        %v870 = vadd.f32 %v614, %v869
        %v871 = vpop.f32.mrb[0].mxu0
        %v872 = vadd.f32 %v618, %v871
        %873 = vmatprep.mubr.bf16.mxu0 0
        %874 = vmatmul.mubr.bf16.gmra.mrb[0].mxu0 %v574
        %v875 = vpop.f32.mrb[0].mxu0
        %v876 = vadd.f32 %v614, %v875
        %v877 = vpop.f32.mrb[0].mxu0
        %v878 = vadd.f32 %v618, %v877
        %v879 = vpop.f32.mrb[0].mxu0
        %v880 = vadd.f32 %v614, %v879
        %v881 = vpop.f32.mrb[0].mxu0
        %v882 = vadd.f32 %v618, %v881
        %883 = vmatprep.mubr.bf16.mxu0 0
        %884 = vmatmul.mubr.bf16.gmra.mrb[0].mxu0 %v575
        %v885 = vpop.f32.mrb[0].mxu0
        %v886 = vadd.f32 %v614, %v885
        %v887 = vpop.f32.mrb[0].mxu0
        %v888 = vadd.f32 %v618, %v887
        %v889 = vpop.f32.mrb[0].mxu0
        %v890 = vadd.f32 %v614, %v889
        %v891 = vpop.f32.mrb[0].mxu0
        %v892 = vadd.f32 %v618, %v891
        %893 = vmatprep.mubr.bf16.mxu0 0
        %894 = vmatmul.mubr.bf16.gmra.mrb[0].mxu0 %v576
        %v895 = vpop.f32.mrb[0].mxu0
        %v896 = vadd.f32 %v614, %v895
        %v897 = vpop.f32.mrb[0].mxu0
        %v898 = vadd.f32 %v618, %v897
        %v899 = vpop.f32.mrb[0].mxu0
        %v900 = vadd.f32 %v614, %v899
        %v901 = vpop.f32.mrb[0].mxu0
        %v902 = vadd.f32 %v618, %v901
        %903 = vdwg.mxu0
        %904 = vmatprep.subr.bf16.mxu0 %v730
        %905 = vmatpush1.bf16.msra.mxu0 %v729
        %906 = vmatprep.subr.bf16.mxu0 %v734
        %907 = vmatpush1.bf16.msra.mxu0 %v733
        %908 = vmatprep.subr.bf16.mxu0 %v738
        %909 = vmatpush1.bf16.msra.mxu0 %v737
        %910 = vmatprep.subr.bf16.mxu0 %v742
        %911 = vmatpush1.bf16.msra.mxu0 %v741
        %912 = vmatprep.subr.bf16.mxu0 %v746
        %913 = vmatpush1.bf16.msra.mxu0 %v745
        %914 = vmatprep.subr.bf16.mxu0 %v750
        %915 = vmatpush1.bf16.msra.mxu0 %v749
        %916 = vmatprep.subr.bf16.mxu0 %v754
        %917 = vmatpush1.bf16.msra.mxu0 %v753
        %918 = vmatprep.subr.bf16.mxu0 %v758
        %919 = vmatpush1.bf16.msra.mxu0 %v757
        %920 = vmatprep.subr.bf16.mxu0 0
        %921 = vmatpush1.bf16.msra.mxu0 0
        %922 = vmatprep.subr.bf16.mxu0 0
        %923 = vmatpush1.bf16.msra.mxu0 0
        %924 = vmatprep.subr.bf16.mxu0 0
        %925 = vmatpush1.bf16.msra.mxu0 0
        %926 = vmatprep.subr.bf16.mxu0 0
        %927 = vmatpush1.bf16.msra.mxu0 0
        %928 = vmatprep.subr.bf16.mxu0 0
        %929 = vmatpush1.bf16.msra.mxu0 0
        %930 = vmatprep.subr.bf16.mxu0 0
        %931 = vmatpush1.bf16.msra.mxu0 0
        %932 = vmatprep.subr.bf16.mxu0 0
        %933 = vmatpush1.bf16.msra.mxu0 0
        %934 = vmatprep.subr.bf16.mxu0 0
        %935 = vmatpush1.bf16.msra.mxu0 0
        %936 = vmatprep.mubr.bf16.mxu0 0
        %937 = vmatmul.mubr.bf16.gmra.mrb[0].mxu0 %v569
        %v938 = vpop.f32.mrb[0].mxu0
        %v939 = vadd.f32 %v622, %v938
        %v940 = vpop.f32.mrb[0].mxu0
        %v941 = vadd.f32 %v626, %v940
        %v942 = vpop.f32.mrb[0].mxu0
        %v943 = vadd.f32 %v622, %v942
        %v944 = vpop.f32.mrb[0].mxu0
        %v945 = vadd.f32 %v626, %v944
        %946 = vmatprep.mubr.bf16.mxu0 0
        %947 = vmatmul.mubr.bf16.gmra.mrb[0].mxu0 %v570
        %v948 = vpop.f32.mrb[0].mxu0
        %v949 = vadd.f32 %v622, %v948
        %v950 = vpop.f32.mrb[0].mxu0
        %v951 = vadd.f32 %v626, %v950
        %v952 = vpop.f32.mrb[0].mxu0
        %v953 = vadd.f32 %v622, %v952
        %v954 = vpop.f32.mrb[0].mxu0
        %v955 = vadd.f32 %v626, %v954
        %956 = vmatprep.mubr.bf16.mxu0 0
        %957 = vmatmul.mubr.bf16.gmra.mrb[0].mxu0 %v571
        %v958 = vpop.f32.mrb[0].mxu0
        %v959 = vadd.f32 %v622, %v958
        %v960 = vpop.f32.mrb[0].mxu0
        %v961 = vadd.f32 %v626, %v960
        %v962 = vpop.f32.mrb[0].mxu0
        %v963 = vadd.f32 %v622, %v962
        %v964 = vpop.f32.mrb[0].mxu0
        %v965 = vadd.f32 %v626, %v964
        %966 = vmatprep.mubr.bf16.mxu0 0
        %967 = vmatmul.mubr.bf16.gmra.mrb[0].mxu0 %v572
        %v968 = vpop.f32.mrb[0].mxu0
        %v969 = vadd.f32 %v622, %v968
        %v970 = vpop.f32.mrb[0].mxu0
        %v971 = vadd.f32 %v626, %v970
        %v972 = vpop.f32.mrb[0].mxu0
        %v973 = vadd.f32 %v622, %v972
        %v974 = vpop.f32.mrb[0].mxu0
        %v975 = vadd.f32 %v626, %v974
        %976 = vmatprep.mubr.bf16.mxu0 0
        %977 = vmatmul.mubr.bf16.gmra.mrb[0].mxu0 %v573
        %v978 = vpop.f32.mrb[0].mxu0
        %v979 = vadd.f32 %v622, %v978
        %v980 = vpop.f32.mrb[0].mxu0
        %v981 = vadd.f32 %v626, %v980
        %v982 = vpop.f32.mrb[0].mxu0
        %v983 = vadd.f32 %v622, %v982
        %v984 = vpop.f32.mrb[0].mxu0
        %v985 = vadd.f32 %v626, %v984
        %986 = vmatprep.mubr.bf16.mxu0 0
        %987 = vmatmul.mubr.bf16.gmra.mrb[0].mxu0 %v574
        %v988 = vpop.f32.mrb[0].mxu0
        %v989 = vadd.f32 %v622, %v988
        %v990 = vpop.f32.mrb[0].mxu0
        %v991 = vadd.f32 %v626, %v990
        %v992 = vpop.f32.mrb[0].mxu0
        %v993 = vadd.f32 %v622, %v992
        %v994 = vpop.f32.mrb[0].mxu0
        %v995 = vadd.f32 %v626, %v994
        %996 = vmatprep.mubr.bf16.mxu0 0
        %997 = vmatmul.mubr.bf16.gmra.mrb[0].mxu0 %v575
        %v998 = vpop.f32.mrb[0].mxu0
        %v999 = vadd.f32 %v622, %v998
        %v1000 = vpop.f32.mrb[0].mxu0
        %v1001 = vadd.f32 %v626, %v1000
        %v1002 = vpop.f32.mrb[0].mxu0
        %v1003 = vadd.f32 %v622, %v1002
        %v1004 = vpop.f32.mrb[0].mxu0
        %v1005 = vadd.f32 %v626, %v1004
        %1006 = vmatprep.mubr.bf16.mxu0 0
        %1007 = vmatmul.mubr.bf16.gmra.mrb[0].mxu0 %v576
        %v1008 = vpop.f32.mrb[0].mxu0
        %v1009 = vadd.f32 %v622, %v1008
        %v1010 = vpop.f32.mrb[0].mxu0
        %v1011 = vadd.f32 %v626, %v1010
        %v1012 = vpop.f32.mrb[0].mxu0
        %v1013 = vadd.f32 %v622, %v1012
        %v1014 = vpop.f32.mrb[0].mxu0
        %v1015 = vadd.f32 %v626, %v1014
        %1016 = vdwg.mxu0
        %v1017 = vmax.f32 %v826, 0.0
        %v1018 = vmax.f32 %v828, 0.0
        %v1019 = vmax.f32 %v939, 0.0
        %v1020 = vmax.f32 %v941, 0.0
        %v1021 = vmax.f32 %v830, 0.0
        %v1022 = vmax.f32 %v832, 0.0
        %v1023 = vmax.f32 %v943, 0.0
        %v1024 = vmax.f32 %v945, 0.0
        %v1025 = vmax.f32 %v836, 0.0
        %v1026 = vmax.f32 %v838, 0.0
        %v1027 = vmax.f32 %v949, 0.0
        %v1028 = vmax.f32 %v951, 0.0
        %v1029 = vmax.f32 %v840, 0.0
        %v1030 = vmax.f32 %v842, 0.0
        %v1031 = vmax.f32 %v953, 0.0
        %v1032 = vmax.f32 %v955, 0.0
        %v1033 = vmax.f32 %v846, 0.0
        %v1034 = vmax.f32 %v848, 0.0
        %v1035 = vmax.f32 %v959, 0.0
        %v1036 = vmax.f32 %v961, 0.0
        %v1037 = vmax.f32 %v850, 0.0
        %v1038 = vmax.f32 %v852, 0.0
        %v1039 = vmax.f32 %v963, 0.0
        %v1040 = vmax.f32 %v965, 0.0
        %v1041 = vmax.f32 %v856, 0.0
        %v1042 = vmax.f32 %v858, 0.0
        %v1043 = vmax.f32 %v969, 0.0
        %v1044 = vmax.f32 %v971, 0.0
        %v1045 = vmax.f32 %v860, 0.0
        %v1046 = vmax.f32 %v862, 0.0
        %v1047 = vmax.f32 %v973, 0.0
        %v1048 = vmax.f32 %v975, 0.0
        %v1049 = vmax.f32 %v866, 0.0
        %v1050 = vmax.f32 %v868, 0.0
        %v1051 = vmax.f32 %v979, 0.0
        %v1052 = vmax.f32 %v981, 0.0
        %v1053 = vmax.f32 %v870, 0.0
        %v1054 = vmax.f32 %v872, 0.0
        %v1055 = vmax.f32 %v983, 0.0
        %v1056 = vmax.f32 %v985, 0.0
        %v1057 = vmax.f32 %v876, 0.0
        %v1058 = vmax.f32 %v878, 0.0
        %v1059 = vmax.f32 %v989, 0.0
        %v1060 = vmax.f32 %v991, 0.0
        %v1061 = vmax.f32 %v880, 0.0
        %v1062 = vmax.f32 %v882, 0.0
        %v1063 = vmax.f32 %v993, 0.0
        %v1064 = vmax.f32 %v995, 0.0
        %v1065 = vmax.f32 %v886, 0.0
        %v1066 = vmax.f32 %v888, 0.0
        %v1067 = vmax.f32 %v999, 0.0
        %v1068 = vmax.f32 %v1001, 0.0
        %v1069 = vmax.f32 %v890, 0.0
        %v1070 = vmax.f32 %v892, 0.0
        %v1071 = vmax.f32 %v1003, 0.0
        %v1072 = vmax.f32 %v1005, 0.0
        %v1073 = vmax.f32 %v896, 0.0
        %v1074 = vmax.f32 %v898, 0.0
        %v1075 = vmax.f32 %v1009, 0.0
        %v1076 = vmax.f32 %v1011, 0.0
        %v1077 = vmax.f32 %v900, 0.0
        %v1078 = vmax.f32 %v902, 0.0
        %v1079 = vmax.f32 %v1013, 0.0
        %v1080 = vmax.f32 %v1015, 0.0
        %v1081 = vpack.c.bf16 %v1021, %v1017
        %v1082 = vpack.c.bf16 %v1022, %v1018
        %v1083 = vpack.c.bf16 %v1023, %v1019
        %v1084 = vpack.c.bf16 %v1024, %v1020
        %v1085 = vpack.c.bf16 %v1029, %v1025
        %v1086 = vpack.c.bf16 %v1030, %v1026
        %v1087 = vpack.c.bf16 %v1031, %v1027
        %v1088 = vpack.c.bf16 %v1032, %v1028
        %v1089 = vpack.c.bf16 %v1037, %v1033
        %v1090 = vpack.c.bf16 %v1038, %v1034
        %v1091 = vpack.c.bf16 %v1039, %v1035
        %v1092 = vpack.c.bf16 %v1040, %v1036
        %v1093 = vpack.c.bf16 %v1045, %v1041
        %v1094 = vpack.c.bf16 %v1046, %v1042
        %v1095 = vpack.c.bf16 %v1047, %v1043
        %v1096 = vpack.c.bf16 %v1048, %v1044
        %v1097 = vpack.c.bf16 %v1053, %v1049
        %v1098 = vpack.c.bf16 %v1054, %v1050
        %v1099 = vpack.c.bf16 %v1055, %v1051
        %v1100 = vpack.c.bf16 %v1056, %v1052
        %v1101 = vpack.c.bf16 %v1061, %v1057
        %v1102 = vpack.c.bf16 %v1062, %v1058
        %v1103 = vpack.c.bf16 %v1063, %v1059
        %v1104 = vpack.c.bf16 %v1064, %v1060
        %v1105 = vpack.c.bf16 %v1069, %v1065
        %v1106 = vpack.c.bf16 %v1070, %v1066
        %v1107 = vpack.c.bf16 %v1071, %v1067
        %v1108 = vpack.c.bf16 %v1072, %v1068
        %v1109 = vpack.c.bf16 %v1077, %v1073
        %v1110 = vpack.c.bf16 %v1078, %v1074
        %v1111 = vpack.c.bf16 %v1079, %v1075
        %v1112 = vpack.c.bf16 %v1080, %v1076
        %v1113 = vld [vmem:[#allocation2] sm:$0xf]
        %v1114 = vld [vmem:[#allocation2 + $0x4] sm:$0xf]
        %v1115 = vld [vmem:[#allocation2 + $0x8] sm:$0xf]
        %v1116 = vld [vmem:[#allocation2 + $0xc] sm:$0xf]
        %v1117 = vld [vmem:[#allocation2 + $0x10] sm:$0xf]
        %v1118 = vld [vmem:[#allocation2 + $0x14] sm:$0xf]
        %v1119 = vld [vmem:[#allocation2 + $0x18] sm:$0xf]
        %v1120 = vld [vmem:[#allocation2 + $0x1c] sm:$0xf]
        %v1121 = vld [vmem:[#allocation2 + $0x20] sm:$0xf]
        %v1122 = vld [vmem:[#allocation2 + $0x24] sm:$0xf]
        %v1123 = vld [vmem:[#allocation2 + $0x28] sm:$0xf]
        %v1124 = vld [vmem:[#allocation2 + $0x2c] sm:$0xf]
        %v1125 = vld [vmem:[#allocation2 + $0x30] sm:$0xf]
        %v1126 = vld [vmem:[#allocation2 + $0x34] sm:$0xf]
        %v1127 = vld [vmem:[#allocation2 + $0x38] sm:$0xf]
        %v1128 = vld [vmem:[#allocation2 + $0x3c] sm:$0xf]
        %v1129 = vld [vmem:[#allocation2 + $0x40] sm:$0xf]
        %v1130 = vld [vmem:[#allocation2 + $0x44] sm:$0xf]
        %v1131 = vld [vmem:[#allocation2 + $0x48] sm:$0xf]
        %v1132 = vld [vmem:[#allocation2 + $0x4c] sm:$0xf]
        %v1133 = vld [vmem:[#allocation2 + $0x50] sm:$0xf]
        %v1134 = vld [vmem:[#allocation2 + $0x54] sm:$0xf]
        %v1135 = vld [vmem:[#allocation2 + $0x58] sm:$0xf]
        %v1136 = vld [vmem:[#allocation2 + $0x5c] sm:$0xf]
        %v1137 = vld [vmem:[#allocation2 + $0x60] sm:$0xf]
        %v1138 = vld [vmem:[#allocation2 + $0x64] sm:$0xf]
        %v1139 = vld [vmem:[#allocation2 + $0x68] sm:$0xf]
        %v1140 = vld [vmem:[#allocation2 + $0x6c] sm:$0xf]
        %v1141 = vld [vmem:[#allocation2 + $0x70] sm:$0xf]
        %v1142 = vld [vmem:[#allocation2 + $0x74] sm:$0xf]
        %v1143 = vld [vmem:[#allocation2 + $0x78] sm:$0xf]
        %v1144 = vld [vmem:[#allocation2 + $0x7c] sm:$0xf]
        %v1145 = vld [vmem:[#allocation2 + $0x80] sm:$0xf]
        %v1146 = vld [vmem:[#allocation2 + $0x84] sm:$0xf]
        %v1147 = vld [vmem:[#allocation2 + $0x88] sm:$0xf]
        %v1148 = vld [vmem:[#allocation2 + $0x8c] sm:$0xf]
        %v1149 = vld [vmem:[#allocation2 + $0x90] sm:$0xf]
        %v1150 = vld [vmem:[#allocation2 + $0x94] sm:$0xf]
        %v1151 = vld [vmem:[#allocation2 + $0x98] sm:$0xf]
        %v1152 = vld [vmem:[#allocation2 + $0x9c] sm:$0xf]
        %v1153 = vld [vmem:[#allocation2 + $0xa0] sm:$0xf]
        %v1154 = vld [vmem:[#allocation2 + $0xa4] sm:$0xf]
        %v1155 = vld [vmem:[#allocation2 + $0xa8] sm:$0xf]
        %v1156 = vld [vmem:[#allocation2 + $0xac] sm:$0xf]
        %v1157 = vld [vmem:[#allocation2 + $0xb0] sm:$0xf]
        %v1158 = vld [vmem:[#allocation2 + $0xb4] sm:$0xf]
        %v1159 = vld [vmem:[#allocation2 + $0xb8] sm:$0xf]
        %v1160 = vld [vmem:[#allocation2 + $0xbc] sm:$0xf]
        %v1161 = vld [vmem:[#allocation2 + $0xc0] sm:$0xf]
        %v1162 = vld [vmem:[#allocation2 + $0xc4] sm:$0xf]
        %v1163 = vld [vmem:[#allocation2 + $0xc8] sm:$0xf]
        %v1164 = vld [vmem:[#allocation2 + $0xcc] sm:$0xf]
        %v1165 = vld [vmem:[#allocation2 + $0xd0] sm:$0xf]
        %v1166 = vld [vmem:[#allocation2 + $0xd4] sm:$0xf]
        %v1167 = vld [vmem:[#allocation2 + $0xd8] sm:$0xf]
        %v1168 = vld [vmem:[#allocation2 + $0xdc] sm:$0xf]
        %v1169 = vld [vmem:[#allocation2 + $0xe0] sm:$0xf]
        %v1170 = vld [vmem:[#allocation2 + $0xe4] sm:$0xf]
        %v1171 = vld [vmem:[#allocation2 + $0xe8] sm:$0xf]
        %v1172 = vld [vmem:[#allocation2 + $0xec] sm:$0xf]
        %v1173 = vld [vmem:[#allocation2 + $0xf0] sm:$0xf]
        %v1174 = vld [vmem:[#allocation2 + $0xf4] sm:$0xf]
        %v1175 = vld [vmem:[#allocation2 + $0xf8] sm:$0xf]
        %v1176 = vld [vmem:[#allocation2 + $0xfc] sm:$0xf]
        %v1241 = vunpack.c.l.b16 %v1113
        %v1242 = vunpack.c.l.b16 %v1114
        %v1243 = vunpack.c.l.b16 %v1115
        %v1244 = vunpack.c.l.b16 %v1116
        %v1245 = vunpack.c.l.b16 %v1117
        %v1246 = vunpack.c.l.b16 %v1118
        %v1247 = vunpack.c.l.b16 %v1119
        %v1248 = vunpack.c.l.b16 %v1120
        %v1249 = vunpack.c.l.b16 %v1121
        %v1250 = vunpack.c.l.b16 %v1122
        %v1251 = vunpack.c.l.b16 %v1123
        %v1252 = vunpack.c.l.b16 %v1124
        %v1253 = vunpack.c.l.b16 %v1125
        %v1254 = vunpack.c.l.b16 %v1126
        %v1255 = vunpack.c.l.b16 %v1127
        %v1256 = vunpack.c.l.b16 %v1128
        %v1257 = vunpack.c.l.b16 %v1129
        %v1258 = vunpack.c.l.b16 %v1130
        %v1259 = vunpack.c.l.b16 %v1131
        %v1260 = vunpack.c.l.b16 %v1132
        %v1261 = vunpack.c.l.b16 %v1133
        %v1262 = vunpack.c.l.b16 %v1134
        %v1263 = vunpack.c.l.b16 %v1135
        %v1264 = vunpack.c.l.b16 %v1136
        %v1265 = vunpack.c.l.b16 %v1137
        %v1266 = vunpack.c.l.b16 %v1138
        %v1267 = vunpack.c.l.b16 %v1139
        %v1268 = vunpack.c.l.b16 %v1140
        %v1269 = vunpack.c.l.b16 %v1141
        %v1270 = vunpack.c.l.b16 %v1142
        %v1271 = vunpack.c.l.b16 %v1143
        %v1272 = vunpack.c.l.b16 %v1144
        %v1273 = vunpack.c.l.b16 %v1145
        %v1274 = vunpack.c.l.b16 %v1146
        %v1275 = vunpack.c.l.b16 %v1147
        %v1276 = vunpack.c.l.b16 %v1148
        %v1277 = vunpack.c.l.b16 %v1149
        %v1278 = vunpack.c.l.b16 %v1150
        %v1279 = vunpack.c.l.b16 %v1151
        %v1280 = vunpack.c.l.b16 %v1152
        %v1281 = vunpack.c.l.b16 %v1153
        %v1282 = vunpack.c.l.b16 %v1154
        %v1283 = vunpack.c.l.b16 %v1155
        %v1284 = vunpack.c.l.b16 %v1156
        %v1285 = vunpack.c.l.b16 %v1157
        %v1286 = vunpack.c.l.b16 %v1158
        %v1287 = vunpack.c.l.b16 %v1159
        %v1288 = vunpack.c.l.b16 %v1160
        %v1289 = vunpack.c.l.b16 %v1161
        %v1290 = vunpack.c.l.b16 %v1162
        %v1291 = vunpack.c.l.b16 %v1163
        %v1292 = vunpack.c.l.b16 %v1164
        %v1293 = vunpack.c.l.b16 %v1165
        %v1294 = vunpack.c.l.b16 %v1166
        %v1295 = vunpack.c.l.b16 %v1167
        %v1296 = vunpack.c.l.b16 %v1168
        %v1297 = vunpack.c.l.b16 %v1169
        %v1298 = vunpack.c.l.b16 %v1170
        %v1299 = vunpack.c.l.b16 %v1171
        %v1300 = vunpack.c.l.b16 %v1172
        %v1301 = vunpack.c.l.b16 %v1173
        %v1302 = vunpack.c.l.b16 %v1174
        %v1303 = vunpack.c.l.b16 %v1175
        %v1304 = vunpack.c.l.b16 %v1176
        %v1305 = vpack.c.b16 %v1242, %v1241
        %v1306 = vpack.c.b16 %v1244, %v1243
        %v1307 = vpack.c.b16 %v1246, %v1245
        %v1308 = vpack.c.b16 %v1248, %v1247
        %v1309 = vpack.c.b16 %v1250, %v1249
        %v1310 = vpack.c.b16 %v1252, %v1251
        %v1311 = vpack.c.b16 %v1254, %v1253
        %v1312 = vpack.c.b16 %v1256, %v1255
        %v1313 = vpack.c.b16 %v1258, %v1257
        %v1314 = vpack.c.b16 %v1260, %v1259
        %v1315 = vpack.c.b16 %v1262, %v1261
        %v1316 = vpack.c.b16 %v1264, %v1263
        %v1317 = vpack.c.b16 %v1266, %v1265
        %v1318 = vpack.c.b16 %v1268, %v1267
        %v1319 = vpack.c.b16 %v1270, %v1269
        %v1320 = vpack.c.b16 %v1272, %v1271
        %v1321 = vpack.c.b16 %v1274, %v1273
        %v1322 = vpack.c.b16 %v1276, %v1275
        %v1323 = vpack.c.b16 %v1278, %v1277
        %v1324 = vpack.c.b16 %v1280, %v1279
        %v1325 = vpack.c.b16 %v1282, %v1281
        %v1326 = vpack.c.b16 %v1284, %v1283
        %v1327 = vpack.c.b16 %v1286, %v1285
        %v1328 = vpack.c.b16 %v1288, %v1287
        %v1329 = vpack.c.b16 %v1290, %v1289
        %v1330 = vpack.c.b16 %v1292, %v1291
        %v1331 = vpack.c.b16 %v1294, %v1293
        %v1332 = vpack.c.b16 %v1296, %v1295
        %v1333 = vpack.c.b16 %v1298, %v1297
        %v1334 = vpack.c.b16 %v1300, %v1299
        %v1335 = vpack.c.b16 %v1302, %v1301
        %v1336 = vpack.c.b16 %v1304, %v1303
        %1369 = vmatprep.subr.bf16.mxu0 0
        %1370 = vmatpush1.bf16.msra.mxu0 %v1305
        %1371 = vmatprep.subr.bf16.mxu0 0
        %1372 = vmatpush1.bf16.msra.mxu0 %v1306
        %1373 = vmatprep.subr.bf16.mxu0 0
        %1374 = vmatpush1.bf16.msra.mxu0 %v1307
        %1375 = vmatprep.subr.bf16.mxu0 0
        %1376 = vmatpush1.bf16.msra.mxu0 %v1308
        %1377 = vmatprep.subr.bf16.mxu0 0
        %1378 = vmatpush1.bf16.msra.mxu0 %v1309
        %1379 = vmatprep.subr.bf16.mxu0 0
        %1380 = vmatpush1.bf16.msra.mxu0 %v1310
        %1381 = vmatprep.subr.bf16.mxu0 0
        %1382 = vmatpush1.bf16.msra.mxu0 %v1311
        %1383 = vmatprep.subr.bf16.mxu0 0
        %1384 = vmatpush1.bf16.msra.mxu0 %v1312
        %1385 = vmatprep.subr.bf16.mxu0 0
        %1386 = vmatpush1.bf16.msra.mxu0 %v1313
        %1387 = vmatprep.subr.bf16.mxu0 0
        %1388 = vmatpush1.bf16.msra.mxu0 %v1314
        %1389 = vmatprep.subr.bf16.mxu0 0
        %1390 = vmatpush1.bf16.msra.mxu0 %v1315
        %1391 = vmatprep.subr.bf16.mxu0 0
        %1392 = vmatpush1.bf16.msra.mxu0 %v1316
        %1393 = vmatprep.subr.bf16.mxu0 0
        %1394 = vmatpush1.bf16.msra.mxu0 %v1317
        %1395 = vmatprep.subr.bf16.mxu0 0
        %1396 = vmatpush1.bf16.msra.mxu0 %v1318
        %1397 = vmatprep.subr.bf16.mxu0 0
        %1398 = vmatpush1.bf16.msra.mxu0 %v1319
        %1399 = vmatprep.subr.bf16.mxu0 0
        %1400 = vmatpush1.bf16.msra.mxu0 %v1320
        %1401 = vmatprep.mubr.bf16.mxu0 %v1082
        %1402 = vmatmul.mubr.bf16.gmra.mrb[0].mxu0 %v1081
        %v1403 = vpop.f32.mrb[0].mxu0
        %v1404 = vadd.f32 0.0, %v1403
        %v1405 = vpop.f32.mrb[0].mxu0
        %v1406 = vpop.f32.mrb[0].mxu0
        %v1407 = vadd.f32 0.0, %v1406
        %v1408 = vpop.f32.mrb[0].mxu0
        %1409 = vmatprep.mubr.bf16.mxu0 %v1086
        %1410 = vmatmul.mubr.bf16.gmra.mrb[0].mxu0 %v1085
        %v1411 = vpop.f32.mrb[0].mxu0
        %v1412 = vadd.f32 0.0, %v1411
        %v1413 = vpop.f32.mrb[0].mxu0
        %v1414 = vpop.f32.mrb[0].mxu0
        %v1415 = vadd.f32 0.0, %v1414
        %v1416 = vpop.f32.mrb[0].mxu0
        %1417 = vmatprep.mubr.bf16.mxu0 %v1090
        %1418 = vmatmul.mubr.bf16.gmra.mrb[0].mxu0 %v1089
        %v1419 = vpop.f32.mrb[0].mxu0
        %v1420 = vadd.f32 0.0, %v1419
        %v1421 = vpop.f32.mrb[0].mxu0
        %v1422 = vpop.f32.mrb[0].mxu0
        %v1423 = vadd.f32 0.0, %v1422
        %v1424 = vpop.f32.mrb[0].mxu0
        %1425 = vmatprep.mubr.bf16.mxu0 %v1094
        %1426 = vmatmul.mubr.bf16.gmra.mrb[0].mxu0 %v1093
        %v1427 = vpop.f32.mrb[0].mxu0
        %v1428 = vadd.f32 0.0, %v1427
        %v1429 = vpop.f32.mrb[0].mxu0
        %v1430 = vpop.f32.mrb[0].mxu0
        %v1431 = vadd.f32 0.0, %v1430
        %v1432 = vpop.f32.mrb[0].mxu0
        %1433 = vmatprep.mubr.bf16.mxu0 %v1098
        %1434 = vmatmul.mubr.bf16.gmra.mrb[0].mxu0 %v1097
        %v1435 = vpop.f32.mrb[0].mxu0
        %v1436 = vadd.f32 0.0, %v1435
        %v1437 = vpop.f32.mrb[0].mxu0
        %v1438 = vpop.f32.mrb[0].mxu0
        %v1439 = vadd.f32 0.0, %v1438
        %v1440 = vpop.f32.mrb[0].mxu0
        %1441 = vmatprep.mubr.bf16.mxu0 %v1102
        %1442 = vmatmul.mubr.bf16.gmra.mrb[0].mxu0 %v1101
        %v1443 = vpop.f32.mrb[0].mxu0
        %v1444 = vadd.f32 0.0, %v1443
        %v1445 = vpop.f32.mrb[0].mxu0
        %v1446 = vpop.f32.mrb[0].mxu0
        %v1447 = vadd.f32 0.0, %v1446
        %v1448 = vpop.f32.mrb[0].mxu0
        %1449 = vmatprep.mubr.bf16.mxu0 %v1106
        %1450 = vmatmul.mubr.bf16.gmra.mrb[0].mxu0 %v1105
        %v1451 = vpop.f32.mrb[0].mxu0
        %v1452 = vadd.f32 0.0, %v1451
        %v1453 = vpop.f32.mrb[0].mxu0
        %v1454 = vpop.f32.mrb[0].mxu0
        %v1455 = vadd.f32 0.0, %v1454
        %v1456 = vpop.f32.mrb[0].mxu0
        %1457 = vmatprep.mubr.bf16.mxu0 %v1110
        %1458 = vmatmul.mubr.bf16.gmra.mrb[0].mxu0 %v1109
        %v1459 = vpop.f32.mrb[0].mxu0
        %v1460 = vadd.f32 0.0, %v1459
        %v1461 = vpop.f32.mrb[0].mxu0
        %v1462 = vpop.f32.mrb[0].mxu0
        %v1463 = vadd.f32 0.0, %v1462
        %v1464 = vpop.f32.mrb[0].mxu0
        %1465 = vdwg.mxu0
        %1466 = vmatprep.subr.bf16.mxu0 0
        %1467 = vmatpush1.bf16.msra.mxu0 %v1321
        %1468 = vmatprep.subr.bf16.mxu0 0
        %1469 = vmatpush1.bf16.msra.mxu0 %v1322
        %1470 = vmatprep.subr.bf16.mxu0 0
        %1471 = vmatpush1.bf16.msra.mxu0 %v1323
        %1472 = vmatprep.subr.bf16.mxu0 0
        %1473 = vmatpush1.bf16.msra.mxu0 %v1324
        %1474 = vmatprep.subr.bf16.mxu0 0
        %1475 = vmatpush1.bf16.msra.mxu0 %v1325
        %1476 = vmatprep.subr.bf16.mxu0 0
        %1477 = vmatpush1.bf16.msra.mxu0 %v1326
        %1478 = vmatprep.subr.bf16.mxu0 0
        %1479 = vmatpush1.bf16.msra.mxu0 %v1327
        %1480 = vmatprep.subr.bf16.mxu0 0
        %1481 = vmatpush1.bf16.msra.mxu0 %v1328
        %1482 = vmatprep.subr.bf16.mxu0 0
        %1483 = vmatpush1.bf16.msra.mxu0 %v1329
        %1484 = vmatprep.subr.bf16.mxu0 0
        %1485 = vmatpush1.bf16.msra.mxu0 %v1330
        %1486 = vmatprep.subr.bf16.mxu0 0
        %1487 = vmatpush1.bf16.msra.mxu0 %v1331
        %1488 = vmatprep.subr.bf16.mxu0 0
        %1489 = vmatpush1.bf16.msra.mxu0 %v1332
        %1490 = vmatprep.subr.bf16.mxu0 0
        %1491 = vmatpush1.bf16.msra.mxu0 %v1333
        %1492 = vmatprep.subr.bf16.mxu0 0
        %1493 = vmatpush1.bf16.msra.mxu0 %v1334
        %1494 = vmatprep.subr.bf16.mxu0 0
        %1495 = vmatpush1.bf16.msra.mxu0 %v1335
        %1496 = vmatprep.subr.bf16.mxu0 0
        %1497 = vmatpush1.bf16.msra.mxu0 %v1336
        %1498 = vmatprep.mubr.bf16.mxu0 %v1084
        %1499 = vmatmul.mubr.bf16.gmra.mrb[0].mxu0 %v1083
        %v1500 = vpop.f32.mrb[0].mxu0
        %v1501 = vadd.f32 %v1404, %v1500
        %v1502 = vpop.f32.mrb[0].mxu0
        %v1503 = vpop.f32.mrb[0].mxu0
        %v1504 = vadd.f32 %v1407, %v1503
        %v1505 = vpop.f32.mrb[0].mxu0
        %1506 = vmatprep.mubr.bf16.mxu0 %v1088
        %1507 = vmatmul.mubr.bf16.gmra.mrb[0].mxu0 %v1087
        %v1508 = vpop.f32.mrb[0].mxu0
        %v1509 = vadd.f32 %v1412, %v1508
        %v1510 = vpop.f32.mrb[0].mxu0
        %v1511 = vpop.f32.mrb[0].mxu0
        %v1512 = vadd.f32 %v1415, %v1511
        %v1513 = vpop.f32.mrb[0].mxu0
        %1514 = vmatprep.mubr.bf16.mxu0 %v1092
        %1515 = vmatmul.mubr.bf16.gmra.mrb[0].mxu0 %v1091
        %v1516 = vpop.f32.mrb[0].mxu0
        %v1517 = vadd.f32 %v1420, %v1516
        %v1518 = vpop.f32.mrb[0].mxu0
        %v1519 = vpop.f32.mrb[0].mxu0
        %v1520 = vadd.f32 %v1423, %v1519
        %v1521 = vpop.f32.mrb[0].mxu0
        %1522 = vmatprep.mubr.bf16.mxu0 %v1096
        %1523 = vmatmul.mubr.bf16.gmra.mrb[0].mxu0 %v1095
        %v1524 = vpop.f32.mrb[0].mxu0
        %v1525 = vadd.f32 %v1428, %v1524
        %v1526 = vpop.f32.mrb[0].mxu0
        %v1527 = vpop.f32.mrb[0].mxu0
        %v1528 = vadd.f32 %v1431, %v1527
        %v1529 = vpop.f32.mrb[0].mxu0
        %1530 = vmatprep.mubr.bf16.mxu0 %v1100
        %1531 = vmatmul.mubr.bf16.gmra.mrb[0].mxu0 %v1099
        %v1532 = vpop.f32.mrb[0].mxu0
        %v1533 = vadd.f32 %v1436, %v1532
        %v1534 = vpop.f32.mrb[0].mxu0
        %v1535 = vpop.f32.mrb[0].mxu0
        %v1536 = vadd.f32 %v1439, %v1535
        %v1537 = vpop.f32.mrb[0].mxu0
        %1538 = vmatprep.mubr.bf16.mxu0 %v1104
        %1539 = vmatmul.mubr.bf16.gmra.mrb[0].mxu0 %v1103
        %v1540 = vpop.f32.mrb[0].mxu0
        %v1541 = vadd.f32 %v1444, %v1540
        %v1542 = vpop.f32.mrb[0].mxu0
        %v1543 = vpop.f32.mrb[0].mxu0
        %v1544 = vadd.f32 %v1447, %v1543
        %v1545 = vpop.f32.mrb[0].mxu0
        %1546 = vmatprep.mubr.bf16.mxu0 %v1108
        %1547 = vmatmul.mubr.bf16.gmra.mrb[0].mxu0 %v1107
        %v1548 = vpop.f32.mrb[0].mxu0
        %v1549 = vadd.f32 %v1452, %v1548
        %v1550 = vpop.f32.mrb[0].mxu0
        %v1551 = vpop.f32.mrb[0].mxu0
        %v1552 = vadd.f32 %v1455, %v1551
        %v1553 = vpop.f32.mrb[0].mxu0
        %1554 = vmatprep.mubr.bf16.mxu0 %v1112
        %1555 = vmatmul.mubr.bf16.gmra.mrb[0].mxu0 %v1111
        %v1556 = vpop.f32.mrb[0].mxu0
        %v1557 = vadd.f32 %v1460, %v1556
        %v1558 = vpop.f32.mrb[0].mxu0
        %v1559 = vpop.f32.mrb[0].mxu0
        %v1560 = vadd.f32 %v1463, %v1559
        %v1561 = vpop.f32.mrb[0].mxu0
        %1562 = vdwg.mxu0
        %v1563 = vpack.c.bf16 %v1504, %v1501
        %v1564 = vpack.c.bf16 %v1512, %v1509
        %v1565 = vpack.c.bf16 %v1520, %v1517
        %v1566 = vpack.c.bf16 %v1528, %v1525
        %v1567 = vpack.c.bf16 %v1536, %v1533
        %v1568 = vpack.c.bf16 %v1544, %v1541
        %v1569 = vpack.c.bf16 %v1552, %v1549
        %v1570 = vpack.c.bf16 %v1560, %v1557
        %v1571 = vld [vmem:[%s6 + $0x4] sm:$0x1]
        %v1573 = vlaneseq
        %v1574 = vshrl.u32 %v1573, 7
        %v1575 = vsub.s32 0, %v1574
        %v1576 = vrot.slane %v1571, %v1575
        %1578 = vmatprep.subr.bf16.mxu0 0
        %1579 = vmatpush1.bf16.msra.mxu0 %v1563
        %1580 = vmatprep.subr.bf16.mxu0 0
        %1581 = vmatpush1.bf16.msra.mxu0 %v1564
        %1582 = vmatprep.subr.bf16.mxu0 0
        %1583 = vmatpush1.bf16.msra.mxu0 %v1565
        %1584 = vmatprep.subr.bf16.mxu0 0
        %1585 = vmatpush1.bf16.msra.mxu0 %v1566
        %1586 = vmatprep.subr.bf16.mxu0 0
        %1587 = vmatpush1.bf16.msra.mxu0 %v1567
        %1588 = vmatprep.subr.bf16.mxu0 0
        %1589 = vmatpush1.bf16.msra.mxu0 %v1568
        %1590 = vmatprep.subr.bf16.mxu0 0
        %1591 = vmatpush1.bf16.msra.mxu0 %v1569
        %1592 = vmatprep.subr.bf16.mxu0 0
        %1593 = vmatpush1.bf16.msra.mxu0 %v1570
        %1594 = vmatprep.subr.bf16.mxu0 0
        %1595 = vmatpush1.bf16.msra.mxu0 0
        %1596 = vmatprep.subr.bf16.mxu0 0
        %1597 = vmatpush1.bf16.msra.mxu0 0
        %1598 = vmatprep.subr.bf16.mxu0 0
        %1599 = vmatpush1.bf16.msra.mxu0 0
        %1600 = vmatprep.subr.bf16.mxu0 0
        %1601 = vmatpush1.bf16.msra.mxu0 0
        %1602 = vmatprep.subr.bf16.mxu0 0
        %1603 = vmatpush1.bf16.msra.mxu0 0
        %1604 = vmatprep.subr.bf16.mxu0 0
        %1605 = vmatpush1.bf16.msra.mxu0 0
        %1606 = vmatprep.subr.bf16.mxu0 0
        %1607 = vmatpush1.bf16.msra.mxu0 0
        %1608 = vmatprep.subr.bf16.mxu0 0
        %1609 = vmatpush1.bf16.msra.mxu0 0
        %1610 = vmatprep.mubr.bf16.mxu0 0
        %1611 = vmatmul.mubr.bf16.gmra.mrb[0].mxu0 %v408
        %v1612 = vpop.f32.mrb[0].mxu0
        %v1613 = vadd.f32 %v1576, %v1612
        %v1614 = vpop.f32.mrb[0].mxu0
        %v1615 = vpop.f32.mrb[0].mxu0
        %v1616 = vadd.f32 %v1576, %v1615
        %v1617 = vpop.f32.mrb[0].mxu0
        %1618 = vmatprep.mubr.bf16.mxu0 0
        %1619 = vmatmul.mubr.bf16.gmra.mrb[0].mxu0 %v409
        %v1620 = vpop.f32.mrb[0].mxu0
        %v1621 = vadd.f32 %v1576, %v1620
        %v1622 = vpop.f32.mrb[0].mxu0
        %v1623 = vpop.f32.mrb[0].mxu0
        %v1624 = vadd.f32 %v1576, %v1623
        %v1625 = vpop.f32.mrb[0].mxu0
        %1626 = vmatprep.mubr.bf16.mxu0 0
        %1627 = vmatmul.mubr.bf16.gmra.mrb[0].mxu0 %v410
        %v1628 = vpop.f32.mrb[0].mxu0
        %v1629 = vadd.f32 %v1576, %v1628
        %v1630 = vpop.f32.mrb[0].mxu0
        %v1631 = vpop.f32.mrb[0].mxu0
        %v1632 = vadd.f32 %v1576, %v1631
        %v1633 = vpop.f32.mrb[0].mxu0
        %1634 = vmatprep.mubr.bf16.mxu0 0
        %1635 = vmatmul.mubr.bf16.gmra.mrb[0].mxu0 %v411
        %v1636 = vpop.f32.mrb[0].mxu0
        %v1637 = vadd.f32 %v1576, %v1636
        %v1638 = vpop.f32.mrb[0].mxu0
        %v1639 = vpop.f32.mrb[0].mxu0
        %v1640 = vadd.f32 %v1576, %v1639
        %v1641 = vpop.f32.mrb[0].mxu0
        %1642 = vmatprep.mubr.bf16.mxu0 0
        %1643 = vmatmul.mubr.bf16.gmra.mrb[0].mxu0 %v412
        %v1644 = vpop.f32.mrb[0].mxu0
        %v1645 = vadd.f32 %v1576, %v1644
        %v1646 = vpop.f32.mrb[0].mxu0
        %v1647 = vpop.f32.mrb[0].mxu0
        %v1648 = vadd.f32 %v1576, %v1647
        %v1649 = vpop.f32.mrb[0].mxu0
        %1650 = vmatprep.mubr.bf16.mxu0 0
        %1651 = vmatmul.mubr.bf16.gmra.mrb[0].mxu0 %v413
        %v1652 = vpop.f32.mrb[0].mxu0
        %v1653 = vadd.f32 %v1576, %v1652
        %v1654 = vpop.f32.mrb[0].mxu0
        %v1655 = vpop.f32.mrb[0].mxu0
        %v1656 = vadd.f32 %v1576, %v1655
        %v1657 = vpop.f32.mrb[0].mxu0
        %1658 = vmatprep.mubr.bf16.mxu0 0
        %1659 = vmatmul.mubr.bf16.gmra.mrb[0].mxu0 %v414
        %v1660 = vpop.f32.mrb[0].mxu0
        %v1661 = vadd.f32 %v1576, %v1660
        %v1662 = vpop.f32.mrb[0].mxu0
        %v1663 = vpop.f32.mrb[0].mxu0
        %v1664 = vadd.f32 %v1576, %v1663
        %v1665 = vpop.f32.mrb[0].mxu0
        %1666 = vmatprep.mubr.bf16.mxu0 0
        %1667 = vmatmul.mubr.bf16.gmra.mrb[0].mxu0 %v415
        %v1668 = vpop.f32.mrb[0].mxu0
        %v1669 = vadd.f32 %v1576, %v1668
        %v1670 = vpop.f32.mrb[0].mxu0
        %v1671 = vpop.f32.mrb[0].mxu0
        %v1672 = vadd.f32 %v1576, %v1671
        %v1673 = vpop.f32.mrb[0].mxu0
        %1674 = vdwg.mxu0
        %v1675 = vmax.f32 %v1613, 0.0
        %v1676 = vmax.f32 %v1616, 0.0
        %v1677 = vmax.f32 %v1621, 0.0
        %v1678 = vmax.f32 %v1624, 0.0
        %v1679 = vmax.f32 %v1629, 0.0
        %v1680 = vmax.f32 %v1632, 0.0
        %v1681 = vmax.f32 %v1637, 0.0
        %v1682 = vmax.f32 %v1640, 0.0
        %v1683 = vmax.f32 %v1645, 0.0
        %v1684 = vmax.f32 %v1648, 0.0
        %v1685 = vmax.f32 %v1653, 0.0
        %v1686 = vmax.f32 %v1656, 0.0
        %v1687 = vmax.f32 %v1661, 0.0
        %v1688 = vmax.f32 %v1664, 0.0
        %v1689 = vmax.f32 %v1669, 0.0
        %v1690 = vmax.f32 %v1672, 0.0
        %v1691 = vpack.c.bf16 %v1676, %v1675
        %v1692 = vpack.c.bf16 %v1678, %v1677
        %v1693 = vpack.c.bf16 %v1680, %v1679
        %v1694 = vpack.c.bf16 %v1682, %v1681
        %v1695 = vpack.c.bf16 %v1684, %v1683
        %v1696 = vpack.c.bf16 %v1686, %v1685
        %v1697 = vpack.c.bf16 %v1688, %v1687
        %v1698 = vpack.c.bf16 %v1690, %v1689
        %v1699 = vld [vmem:[#allocation4] sm:$0xf]
        %v1700 = vld [vmem:[#allocation4 + $0x4] sm:$0xf]
        %v1701 = vld [vmem:[#allocation4 + $0x8] sm:$0xf]
        %v1702 = vld [vmem:[#allocation4 + $0xc] sm:$0xf]
        %v1703 = vld [vmem:[#allocation4 + $0x10] sm:$0xf]
        %v1704 = vld [vmem:[#allocation4 + $0x14] sm:$0xf]
        %v1705 = vld [vmem:[#allocation4 + $0x18] sm:$0xf]
        %v1706 = vld [vmem:[#allocation4 + $0x1c] sm:$0xf]
        %v1707 = vld [vmem:[#allocation4 + $0x20] sm:$0xf]
        %v1708 = vld [vmem:[#allocation4 + $0x24] sm:$0xf]
        %v1709 = vld [vmem:[#allocation4 + $0x28] sm:$0xf]
        %v1710 = vld [vmem:[#allocation4 + $0x2c] sm:$0xf]
        %v1711 = vld [vmem:[#allocation4 + $0x30] sm:$0xf]
        %v1712 = vld [vmem:[#allocation4 + $0x34] sm:$0xf]
        %v1713 = vld [vmem:[#allocation4 + $0x38] sm:$0xf]
        %v1714 = vld [vmem:[#allocation4 + $0x3c] sm:$0xf]
        %v1731 = vunpack.c.l.b16 %v1699
        %v1732 = vunpack.c.l.b16 %v1700
        %v1733 = vunpack.c.l.b16 %v1701
        %v1734 = vunpack.c.l.b16 %v1702
        %v1735 = vunpack.c.l.b16 %v1703
        %v1736 = vunpack.c.l.b16 %v1704
        %v1737 = vunpack.c.l.b16 %v1705
        %v1738 = vunpack.c.l.b16 %v1706
        %v1739 = vunpack.c.l.b16 %v1707
        %v1740 = vunpack.c.l.b16 %v1708
        %v1741 = vunpack.c.l.b16 %v1709
        %v1742 = vunpack.c.l.b16 %v1710
        %v1743 = vunpack.c.l.b16 %v1711
        %v1744 = vunpack.c.l.b16 %v1712
        %v1745 = vunpack.c.l.b16 %v1713
        %v1746 = vunpack.c.l.b16 %v1714
        %v1747 = vpack.c.b16 %v1732, %v1731
        %v1748 = vpack.c.b16 %v1734, %v1733
        %v1749 = vpack.c.b16 %v1736, %v1735
        %v1750 = vpack.c.b16 %v1738, %v1737
        %v1751 = vpack.c.b16 %v1740, %v1739
        %v1752 = vpack.c.b16 %v1742, %v1741
        %v1753 = vpack.c.b16 %v1744, %v1743
        %v1754 = vpack.c.b16 %v1746, %v1745
        %1763 = vmatprep.subr.bf16.mxu0 0
        %1764 = vmatpush1.bf16.msra.mxu0 %v1747
        %1765 = vmatprep.subr.bf16.mxu0 0
        %1766 = vmatpush1.bf16.msra.mxu0 %v1748
        %1767 = vmatprep.subr.bf16.mxu0 0
        %1768 = vmatpush1.bf16.msra.mxu0 %v1749
        %1769 = vmatprep.subr.bf16.mxu0 0
        %1770 = vmatpush1.bf16.msra.mxu0 %v1750
        %1771 = vmatprep.subr.bf16.mxu0 0
        %1772 = vmatpush1.bf16.msra.mxu0 %v1751
        %1773 = vmatprep.subr.bf16.mxu0 0
        %1774 = vmatpush1.bf16.msra.mxu0 %v1752
        %1775 = vmatprep.subr.bf16.mxu0 0
        %1776 = vmatpush1.bf16.msra.mxu0 %v1753
        %1777 = vmatprep.subr.bf16.mxu0 0
        %1778 = vmatpush1.bf16.msra.mxu0 %v1754
        %1779 = vmatprep.subr.bf16.mxu0 0
        %1780 = vmatpush1.bf16.msra.mxu0 0
        %1781 = vmatprep.subr.bf16.mxu0 0
        %1782 = vmatpush1.bf16.msra.mxu0 0
        %1783 = vmatprep.subr.bf16.mxu0 0
        %1784 = vmatpush1.bf16.msra.mxu0 0
        %1785 = vmatprep.subr.bf16.mxu0 0
        %1786 = vmatpush1.bf16.msra.mxu0 0
        %1787 = vmatprep.subr.bf16.mxu0 0
        %1788 = vmatpush1.bf16.msra.mxu0 0
        %1789 = vmatprep.subr.bf16.mxu0 0
        %1790 = vmatpush1.bf16.msra.mxu0 0
        %1791 = vmatprep.subr.bf16.mxu0 0
        %1792 = vmatpush1.bf16.msra.mxu0 0
        %1793 = vmatprep.subr.bf16.mxu0 0
        %1794 = vmatpush1.bf16.msra.mxu0 0
        %1795 = vmatprep.mubr.bf16.mxu0 0
        %1796 = vmatmul.mubr.bf16.gmra.mrb[0].mxu0 %v1691
        %v1797 = vpop.f32.mrb[0].mxu0
        %v1798 = vadd.f32 0.0, %v1797
        %v1799 = vpop.f32.mrb[0].mxu0
        %v1800 = vpop.f32.mrb[0].mxu0
        %v1801 = vadd.f32 0.0, %v1800
        %v1802 = vpop.f32.mrb[0].mxu0
        %1803 = vmatprep.mubr.bf16.mxu0 0
        %1804 = vmatmul.mubr.bf16.gmra.mrb[0].mxu0 %v1692
        %v1805 = vpop.f32.mrb[0].mxu0
        %v1806 = vadd.f32 0.0, %v1805
        %v1807 = vpop.f32.mrb[0].mxu0
        %v1808 = vpop.f32.mrb[0].mxu0
        %v1809 = vadd.f32 0.0, %v1808
        %v1810 = vpop.f32.mrb[0].mxu0
        %1811 = vmatprep.mubr.bf16.mxu0 0
        %1812 = vmatmul.mubr.bf16.gmra.mrb[0].mxu0 %v1693
        %v1813 = vpop.f32.mrb[0].mxu0
        %v1814 = vadd.f32 0.0, %v1813
        %v1815 = vpop.f32.mrb[0].mxu0
        %v1816 = vpop.f32.mrb[0].mxu0
        %v1817 = vadd.f32 0.0, %v1816
        %v1818 = vpop.f32.mrb[0].mxu0
        %1819 = vmatprep.mubr.bf16.mxu0 0
        %1820 = vmatmul.mubr.bf16.gmra.mrb[0].mxu0 %v1694
        %v1821 = vpop.f32.mrb[0].mxu0
        %v1822 = vadd.f32 0.0, %v1821
        %v1823 = vpop.f32.mrb[0].mxu0
        %v1824 = vpop.f32.mrb[0].mxu0
        %v1825 = vadd.f32 0.0, %v1824
        %v1826 = vpop.f32.mrb[0].mxu0
        %1827 = vmatprep.mubr.bf16.mxu0 0
        %1828 = vmatmul.mubr.bf16.gmra.mrb[0].mxu0 %v1695
        %v1829 = vpop.f32.mrb[0].mxu0
        %v1830 = vadd.f32 0.0, %v1829
        %v1831 = vpop.f32.mrb[0].mxu0
        %v1832 = vpop.f32.mrb[0].mxu0
        %v1833 = vadd.f32 0.0, %v1832
        %v1834 = vpop.f32.mrb[0].mxu0
        %1835 = vmatprep.mubr.bf16.mxu0 0
        %1836 = vmatmul.mubr.bf16.gmra.mrb[0].mxu0 %v1696
        %v1837 = vpop.f32.mrb[0].mxu0
        %v1838 = vadd.f32 0.0, %v1837
        %v1839 = vpop.f32.mrb[0].mxu0
        %v1840 = vpop.f32.mrb[0].mxu0
        %v1841 = vadd.f32 0.0, %v1840
        %v1842 = vpop.f32.mrb[0].mxu0
        %1843 = vmatprep.mubr.bf16.mxu0 0
        %1844 = vmatmul.mubr.bf16.gmra.mrb[0].mxu0 %v1697
        %v1845 = vpop.f32.mrb[0].mxu0
        %v1846 = vadd.f32 0.0, %v1845
        %v1847 = vpop.f32.mrb[0].mxu0
        %v1848 = vpop.f32.mrb[0].mxu0
        %v1849 = vadd.f32 0.0, %v1848
        %v1850 = vpop.f32.mrb[0].mxu0
        %1851 = vmatprep.mubr.bf16.mxu0 0
        %1852 = vmatmul.mubr.bf16.gmra.mrb[0].mxu0 %v1698
        %v1853 = vpop.f32.mrb[0].mxu0
        %v1854 = vadd.f32 0.0, %v1853
        %v1855 = vpop.f32.mrb[0].mxu0
        %v1856 = vpop.f32.mrb[0].mxu0
        %v1857 = vadd.f32 0.0, %v1856
        %v1858 = vpop.f32.mrb[0].mxu0
        %1859 = vdwg.mxu0
        %v1860 = vpack.c.bf16 %v1801, %v1798
        %v1861 = vpack.c.bf16 %v1809, %v1806
        %v1862 = vpack.c.bf16 %v1817, %v1814
        %v1863 = vpack.c.bf16 %v1825, %v1822
        %v1864 = vpack.c.bf16 %v1833, %v1830
        %v1865 = vpack.c.bf16 %v1841, %v1838
        %v1866 = vpack.c.bf16 %v1849, %v1846
        %v1867 = vpack.c.bf16 %v1857, %v1854
        %v1868 = vld [vmem:[%s6 + $0x5] sm:$0x1]
        %v1870 = vlaneseq
        %v1871 = vshrl.u32 %v1870, 7
        %v1872 = vsub.s32 0, %v1871
        %v1873 = vrot.slane %v1868, %v1872
        %1875 = vmatprep.subr.bf16.mxu0 0
        %1876 = vmatpush1.bf16.msra.mxu0 %v1860
        %1877 = vmatprep.subr.bf16.mxu0 0
        %1878 = vmatpush1.bf16.msra.mxu0 %v1861
        %1879 = vmatprep.subr.bf16.mxu0 0
        %1880 = vmatpush1.bf16.msra.mxu0 %v1862
        %1881 = vmatprep.subr.bf16.mxu0 0
        %1882 = vmatpush1.bf16.msra.mxu0 %v1863
        %1883 = vmatprep.subr.bf16.mxu0 0
        %1884 = vmatpush1.bf16.msra.mxu0 %v1864
        %1885 = vmatprep.subr.bf16.mxu0 0
        %1886 = vmatpush1.bf16.msra.mxu0 %v1865
        %1887 = vmatprep.subr.bf16.mxu0 0
        %1888 = vmatpush1.bf16.msra.mxu0 %v1866
        %1889 = vmatprep.subr.bf16.mxu0 0
        %1890 = vmatpush1.bf16.msra.mxu0 %v1867
        %1891 = vmatprep.subr.bf16.mxu0 0
        %1892 = vmatpush1.bf16.msra.mxu0 0
        %1893 = vmatprep.subr.bf16.mxu0 0
        %1894 = vmatpush1.bf16.msra.mxu0 0
        %1895 = vmatprep.subr.bf16.mxu0 0
        %1896 = vmatpush1.bf16.msra.mxu0 0
        %1897 = vmatprep.subr.bf16.mxu0 0
        %1898 = vmatpush1.bf16.msra.mxu0 0
        %1899 = vmatprep.subr.bf16.mxu0 0
        %1900 = vmatpush1.bf16.msra.mxu0 0
        %1901 = vmatprep.subr.bf16.mxu0 0
        %1902 = vmatpush1.bf16.msra.mxu0 0
        %1903 = vmatprep.subr.bf16.mxu0 0
        %1904 = vmatpush1.bf16.msra.mxu0 0
        %1905 = vmatprep.subr.bf16.mxu0 0
        %1906 = vmatpush1.bf16.msra.mxu0 0
        %1907 = vmatprep.mubr.bf16.mxu0 0
        %1908 = vmatmul.mubr.bf16.gmra.mrb[0].mxu0 %v408
        %v1909 = vpop.f32.mrb[0].mxu0
        %v1910 = vadd.f32 %v1873, %v1909
        %v1911 = vpop.f32.mrb[0].mxu0
        %v1912 = vpop.f32.mrb[0].mxu0
        %v1913 = vadd.f32 %v1873, %v1912
        %v1914 = vpop.f32.mrb[0].mxu0
        %1915 = vmatprep.mubr.bf16.mxu0 0
        %1916 = vmatmul.mubr.bf16.gmra.mrb[0].mxu0 %v409
        %v1917 = vpop.f32.mrb[0].mxu0
        %v1918 = vadd.f32 %v1873, %v1917
        %v1919 = vpop.f32.mrb[0].mxu0
        %v1920 = vpop.f32.mrb[0].mxu0
        %v1921 = vadd.f32 %v1873, %v1920
        %v1922 = vpop.f32.mrb[0].mxu0
        %1923 = vmatprep.mubr.bf16.mxu0 0
        %1924 = vmatmul.mubr.bf16.gmra.mrb[0].mxu0 %v410
        %v1925 = vpop.f32.mrb[0].mxu0
        %v1926 = vadd.f32 %v1873, %v1925
        %v1927 = vpop.f32.mrb[0].mxu0
        %v1928 = vpop.f32.mrb[0].mxu0
        %v1929 = vadd.f32 %v1873, %v1928
        %v1930 = vpop.f32.mrb[0].mxu0
        %1931 = vmatprep.mubr.bf16.mxu0 0
        %1932 = vmatmul.mubr.bf16.gmra.mrb[0].mxu0 %v411
        %v1933 = vpop.f32.mrb[0].mxu0
        %v1934 = vadd.f32 %v1873, %v1933
        %v1935 = vpop.f32.mrb[0].mxu0
        %v1936 = vpop.f32.mrb[0].mxu0
        %v1937 = vadd.f32 %v1873, %v1936
        %v1938 = vpop.f32.mrb[0].mxu0
        %1939 = vmatprep.mubr.bf16.mxu0 0
        %1940 = vmatmul.mubr.bf16.gmra.mrb[0].mxu0 %v412
        %v1941 = vpop.f32.mrb[0].mxu0
        %v1942 = vadd.f32 %v1873, %v1941
        %v1943 = vpop.f32.mrb[0].mxu0
        %v1944 = vpop.f32.mrb[0].mxu0
        %v1945 = vadd.f32 %v1873, %v1944
        %v1946 = vpop.f32.mrb[0].mxu0
        %1947 = vmatprep.mubr.bf16.mxu0 0
        %1948 = vmatmul.mubr.bf16.gmra.mrb[0].mxu0 %v413
        %v1949 = vpop.f32.mrb[0].mxu0
        %v1950 = vadd.f32 %v1873, %v1949
        %v1951 = vpop.f32.mrb[0].mxu0
        %v1952 = vpop.f32.mrb[0].mxu0
        %v1953 = vadd.f32 %v1873, %v1952
        %v1954 = vpop.f32.mrb[0].mxu0
        %1955 = vmatprep.mubr.bf16.mxu0 0
        %1956 = vmatmul.mubr.bf16.gmra.mrb[0].mxu0 %v414
        %v1957 = vpop.f32.mrb[0].mxu0
        %v1958 = vadd.f32 %v1873, %v1957
        %v1959 = vpop.f32.mrb[0].mxu0
        %v1960 = vpop.f32.mrb[0].mxu0
        %v1961 = vadd.f32 %v1873, %v1960
        %v1962 = vpop.f32.mrb[0].mxu0
        %1963 = vmatprep.mubr.bf16.mxu0 0
        %1964 = vmatmul.mubr.bf16.gmra.mrb[0].mxu0 %v415
        %v1965 = vpop.f32.mrb[0].mxu0
        %v1966 = vadd.f32 %v1873, %v1965
        %v1967 = vpop.f32.mrb[0].mxu0
        %v1968 = vpop.f32.mrb[0].mxu0
        %v1969 = vadd.f32 %v1873, %v1968
        %v1970 = vpop.f32.mrb[0].mxu0
        %1971 = vdwg.mxu0
        %v1972 = vmax.f32 %v1910, 0.0
        %v1973 = vmax.f32 %v1913, 0.0
        %v1974 = vmax.f32 %v1918, 0.0
        %v1975 = vmax.f32 %v1921, 0.0
        %v1976 = vmax.f32 %v1926, 0.0
        %v1977 = vmax.f32 %v1929, 0.0
        %v1978 = vmax.f32 %v1934, 0.0
        %v1979 = vmax.f32 %v1937, 0.0
        %v1980 = vmax.f32 %v1942, 0.0
        %v1981 = vmax.f32 %v1945, 0.0
        %v1982 = vmax.f32 %v1950, 0.0
        %v1983 = vmax.f32 %v1953, 0.0
        %v1984 = vmax.f32 %v1958, 0.0
        %v1985 = vmax.f32 %v1961, 0.0
        %v1986 = vmax.f32 %v1966, 0.0
        %v1987 = vmax.f32 %v1969, 0.0
        %v1988 = vpack.c.bf16 %v1973, %v1972
        %v1989 = vpack.c.bf16 %v1975, %v1974
        %v1990 = vpack.c.bf16 %v1977, %v1976
        %v1991 = vpack.c.bf16 %v1979, %v1978
        %v1992 = vpack.c.bf16 %v1981, %v1980
        %v1993 = vpack.c.bf16 %v1983, %v1982
        %v1994 = vpack.c.bf16 %v1985, %v1984
        %v1995 = vpack.c.bf16 %v1987, %v1986
        %v1996 = vld [vmem:[#allocation6] sm:$0xf]
        %v1997 = vld [vmem:[#allocation6 + $0x4] sm:$0xf]
        %v1998 = vld [vmem:[#allocation6 + $0x8] sm:$0xf]
        %v1999 = vld [vmem:[#allocation6 + $0xc] sm:$0xf]
        %v2000 = vld [vmem:[#allocation6 + $0x10] sm:$0xf]
        %v2001 = vld [vmem:[#allocation6 + $0x14] sm:$0xf]
        %v2002 = vld [vmem:[#allocation6 + $0x18] sm:$0xf]
        %v2003 = vld [vmem:[#allocation6 + $0x1c] sm:$0xf]
        %v2004 = vld [vmem:[#allocation6 + $0x20] sm:$0xf]
        %v2005 = vld [vmem:[#allocation6 + $0x24] sm:$0xf]
        %v2006 = vld [vmem:[#allocation6 + $0x28] sm:$0xf]
        %v2007 = vld [vmem:[#allocation6 + $0x2c] sm:$0xf]
        %v2008 = vld [vmem:[#allocation6 + $0x30] sm:$0xf]
        %v2009 = vld [vmem:[#allocation6 + $0x34] sm:$0xf]
        %v2010 = vld [vmem:[#allocation6 + $0x38] sm:$0xf]
        %v2011 = vld [vmem:[#allocation6 + $0x3c] sm:$0xf]
        %v2028 = vunpack.c.l.b16 %v1996
        %v2029 = vunpack.c.l.b16 %v1997
        %v2030 = vunpack.c.l.b16 %v1998
        %v2031 = vunpack.c.l.b16 %v1999
        %v2032 = vunpack.c.l.b16 %v2000
        %v2033 = vunpack.c.l.b16 %v2001
        %v2034 = vunpack.c.l.b16 %v2002
        %v2035 = vunpack.c.l.b16 %v2003
        %v2036 = vunpack.c.l.b16 %v2004
        %v2037 = vunpack.c.l.b16 %v2005
        %v2038 = vunpack.c.l.b16 %v2006
        %v2039 = vunpack.c.l.b16 %v2007
        %v2040 = vunpack.c.l.b16 %v2008
        %v2041 = vunpack.c.l.b16 %v2009
        %v2042 = vunpack.c.l.b16 %v2010
        %v2043 = vunpack.c.l.b16 %v2011
        %v2044 = vpack.c.b16 %v2029, %v2028
        %v2045 = vpack.c.b16 %v2031, %v2030
        %v2046 = vpack.c.b16 %v2033, %v2032
        %v2047 = vpack.c.b16 %v2035, %v2034
        %v2048 = vpack.c.b16 %v2037, %v2036
        %v2049 = vpack.c.b16 %v2039, %v2038
        %v2050 = vpack.c.b16 %v2041, %v2040
        %v2051 = vpack.c.b16 %v2043, %v2042
        %2060 = vmatprep.subr.bf16.mxu0 0
        %2061 = vmatpush1.bf16.msra.mxu0 %v2044
        %2062 = vmatprep.subr.bf16.mxu0 0
        %2063 = vmatpush1.bf16.msra.mxu0 %v2045
        %2064 = vmatprep.subr.bf16.mxu0 0
        %2065 = vmatpush1.bf16.msra.mxu0 %v2046
        %2066 = vmatprep.subr.bf16.mxu0 0
        %2067 = vmatpush1.bf16.msra.mxu0 %v2047
        %2068 = vmatprep.subr.bf16.mxu0 0
        %2069 = vmatpush1.bf16.msra.mxu0 %v2048
        %2070 = vmatprep.subr.bf16.mxu0 0
        %2071 = vmatpush1.bf16.msra.mxu0 %v2049
        %2072 = vmatprep.subr.bf16.mxu0 0
        %2073 = vmatpush1.bf16.msra.mxu0 %v2050
        %2074 = vmatprep.subr.bf16.mxu0 0
        %2075 = vmatpush1.bf16.msra.mxu0 %v2051
        %2076 = vmatprep.subr.bf16.mxu0 0
        %2077 = vmatpush1.bf16.msra.mxu0 0
        %2078 = vmatprep.subr.bf16.mxu0 0
        %2079 = vmatpush1.bf16.msra.mxu0 0
        %2080 = vmatprep.subr.bf16.mxu0 0
        %2081 = vmatpush1.bf16.msra.mxu0 0
        %2082 = vmatprep.subr.bf16.mxu0 0
        %2083 = vmatpush1.bf16.msra.mxu0 0
        %2084 = vmatprep.subr.bf16.mxu0 0
        %2085 = vmatpush1.bf16.msra.mxu0 0
        %2086 = vmatprep.subr.bf16.mxu0 0
        %2087 = vmatpush1.bf16.msra.mxu0 0
        %2088 = vmatprep.subr.bf16.mxu0 0
        %2089 = vmatpush1.bf16.msra.mxu0 0
        %2090 = vmatprep.subr.bf16.mxu0 0
        %2091 = vmatpush1.bf16.msra.mxu0 0
        %2092 = vmatprep.mubr.bf16.mxu0 0
        %2093 = vmatmul.mubr.bf16.gmra.mrb[0].mxu0 %v1988
        %v2094 = vpop.f32.mrb[0].mxu0
        %v2095 = vadd.f32 0.0, %v2094
        %v2096 = vpop.f32.mrb[0].mxu0
        %v2097 = vpop.f32.mrb[0].mxu0
        %v2098 = vadd.f32 0.0, %v2097
        %v2099 = vpop.f32.mrb[0].mxu0
        %2100 = vmatprep.mubr.bf16.mxu0 0
        %2101 = vmatmul.mubr.bf16.gmra.mrb[0].mxu0 %v1989
        %v2102 = vpop.f32.mrb[0].mxu0
        %v2103 = vadd.f32 0.0, %v2102
        %v2104 = vpop.f32.mrb[0].mxu0
        %v2105 = vpop.f32.mrb[0].mxu0
        %v2106 = vadd.f32 0.0, %v2105
        %v2107 = vpop.f32.mrb[0].mxu0
        %2108 = vmatprep.mubr.bf16.mxu0 0
        %2109 = vmatmul.mubr.bf16.gmra.mrb[0].mxu0 %v1990
        %v2110 = vpop.f32.mrb[0].mxu0
        %v2111 = vadd.f32 0.0, %v2110
        %v2112 = vpop.f32.mrb[0].mxu0
        %v2113 = vpop.f32.mrb[0].mxu0
        %v2114 = vadd.f32 0.0, %v2113
        %v2115 = vpop.f32.mrb[0].mxu0
        %2116 = vmatprep.mubr.bf16.mxu0 0
        %2117 = vmatmul.mubr.bf16.gmra.mrb[0].mxu0 %v1991
        %v2118 = vpop.f32.mrb[0].mxu0
        %v2119 = vadd.f32 0.0, %v2118
        %v2120 = vpop.f32.mrb[0].mxu0
        %v2121 = vpop.f32.mrb[0].mxu0
        %v2122 = vadd.f32 0.0, %v2121
        %v2123 = vpop.f32.mrb[0].mxu0
        %2124 = vmatprep.mubr.bf16.mxu0 0
        %2125 = vmatmul.mubr.bf16.gmra.mrb[0].mxu0 %v1992
        %v2126 = vpop.f32.mrb[0].mxu0
        %v2127 = vadd.f32 0.0, %v2126
        %v2128 = vpop.f32.mrb[0].mxu0
        %v2129 = vpop.f32.mrb[0].mxu0
        %v2130 = vadd.f32 0.0, %v2129
        %v2131 = vpop.f32.mrb[0].mxu0
        %2132 = vmatprep.mubr.bf16.mxu0 0
        %2133 = vmatmul.mubr.bf16.gmra.mrb[0].mxu0 %v1993
        %v2134 = vpop.f32.mrb[0].mxu0
        %v2135 = vadd.f32 0.0, %v2134
        %v2136 = vpop.f32.mrb[0].mxu0
        %v2137 = vpop.f32.mrb[0].mxu0
        %v2138 = vadd.f32 0.0, %v2137
        %v2139 = vpop.f32.mrb[0].mxu0
        %2140 = vmatprep.mubr.bf16.mxu0 0
        %2141 = vmatmul.mubr.bf16.gmra.mrb[0].mxu0 %v1994
        %v2142 = vpop.f32.mrb[0].mxu0
        %v2143 = vadd.f32 0.0, %v2142
        %v2144 = vpop.f32.mrb[0].mxu0
        %v2145 = vpop.f32.mrb[0].mxu0
        %v2146 = vadd.f32 0.0, %v2145
        %v2147 = vpop.f32.mrb[0].mxu0
        %2148 = vmatprep.mubr.bf16.mxu0 0
        %2149 = vmatmul.mubr.bf16.gmra.mrb[0].mxu0 %v1995
        %v2150 = vpop.f32.mrb[0].mxu0
        %v2151 = vadd.f32 0.0, %v2150
        %v2152 = vpop.f32.mrb[0].mxu0
        %v2153 = vpop.f32.mrb[0].mxu0
        %v2154 = vadd.f32 0.0, %v2153
        %v2155 = vpop.f32.mrb[0].mxu0
        %2156 = vdwg.mxu0
        %v2157 = vpack.c.bf16 %v2098, %v2095
        %v2158 = vpack.c.bf16 %v2106, %v2103
        %v2159 = vpack.c.bf16 %v2114, %v2111
        %v2160 = vpack.c.bf16 %v2122, %v2119
        %v2161 = vpack.c.bf16 %v2130, %v2127
        %v2162 = vpack.c.bf16 %v2138, %v2135
        %v2163 = vpack.c.bf16 %v2146, %v2143
        %v2164 = vpack.c.bf16 %v2154, %v2151
        %v2165 = vld [vmem:[%s6 + $0x6] sm:$0x1]
        %v2167 = vlaneseq
        %v2168 = vshrl.u32 %v2167, 7
        %v2169 = vsub.s32 0, %v2168
        %v2170 = vrot.slane %v2165, %v2169
        %2172 = vmatprep.subr.bf16.mxu0 0
        %2173 = vmatpush1.bf16.msra.mxu0 %v2157
        %2174 = vmatprep.subr.bf16.mxu0 0
        %2175 = vmatpush1.bf16.msra.mxu0 %v2158
        %2176 = vmatprep.subr.bf16.mxu0 0
        %2177 = vmatpush1.bf16.msra.mxu0 %v2159
        %2178 = vmatprep.subr.bf16.mxu0 0
        %2179 = vmatpush1.bf16.msra.mxu0 %v2160
        %2180 = vmatprep.subr.bf16.mxu0 0
        %2181 = vmatpush1.bf16.msra.mxu0 %v2161
        %2182 = vmatprep.subr.bf16.mxu0 0
        %2183 = vmatpush1.bf16.msra.mxu0 %v2162
        %2184 = vmatprep.subr.bf16.mxu0 0
        %2185 = vmatpush1.bf16.msra.mxu0 %v2163
        %2186 = vmatprep.subr.bf16.mxu0 0
        %2187 = vmatpush1.bf16.msra.mxu0 %v2164
        %2188 = vmatprep.subr.bf16.mxu0 0
        %2189 = vmatpush1.bf16.msra.mxu0 0
        %2190 = vmatprep.subr.bf16.mxu0 0
        %2191 = vmatpush1.bf16.msra.mxu0 0
        %2192 = vmatprep.subr.bf16.mxu0 0
        %2193 = vmatpush1.bf16.msra.mxu0 0
        %2194 = vmatprep.subr.bf16.mxu0 0
        %2195 = vmatpush1.bf16.msra.mxu0 0
        %2196 = vmatprep.subr.bf16.mxu0 0
        %2197 = vmatpush1.bf16.msra.mxu0 0
        %2198 = vmatprep.subr.bf16.mxu0 0
        %2199 = vmatpush1.bf16.msra.mxu0 0
        %2200 = vmatprep.subr.bf16.mxu0 0
        %2201 = vmatpush1.bf16.msra.mxu0 0
        %2202 = vmatprep.subr.bf16.mxu0 0
        %2203 = vmatpush1.bf16.msra.mxu0 0
        %2204 = vmatprep.mubr.bf16.mxu0 0
        %2205 = vmatmul.mubr.bf16.gmra.mrb[0].mxu0 %v408
        %v2206 = vpop.f32.mrb[0].mxu0
        %v2207 = vadd.f32 %v2170, %v2206
        %v2208 = vpop.f32.mrb[0].mxu0
        %v2209 = vpop.f32.mrb[0].mxu0
        %v2210 = vadd.f32 %v2170, %v2209
        %v2211 = vpop.f32.mrb[0].mxu0
        %2212 = vmatprep.mubr.bf16.mxu0 0
        %2213 = vmatmul.mubr.bf16.gmra.mrb[0].mxu0 %v409
        %v2214 = vpop.f32.mrb[0].mxu0
        %v2215 = vadd.f32 %v2170, %v2214
        %v2216 = vpop.f32.mrb[0].mxu0
        %v2217 = vpop.f32.mrb[0].mxu0
        %v2218 = vadd.f32 %v2170, %v2217
        %v2219 = vpop.f32.mrb[0].mxu0
        %2220 = vmatprep.mubr.bf16.mxu0 0
        %2221 = vmatmul.mubr.bf16.gmra.mrb[0].mxu0 %v410
        %v2222 = vpop.f32.mrb[0].mxu0
        %v2223 = vadd.f32 %v2170, %v2222
        %v2224 = vpop.f32.mrb[0].mxu0
        %v2225 = vpop.f32.mrb[0].mxu0
        %v2226 = vadd.f32 %v2170, %v2225
        %v2227 = vpop.f32.mrb[0].mxu0
        %2228 = vmatprep.mubr.bf16.mxu0 0
        %2229 = vmatmul.mubr.bf16.gmra.mrb[0].mxu0 %v411
        %v2230 = vpop.f32.mrb[0].mxu0
        %v2231 = vadd.f32 %v2170, %v2230
        %v2232 = vpop.f32.mrb[0].mxu0
        %v2233 = vpop.f32.mrb[0].mxu0
        %v2234 = vadd.f32 %v2170, %v2233
        %v2235 = vpop.f32.mrb[0].mxu0
        %2236 = vmatprep.mubr.bf16.mxu0 0
        %2237 = vmatmul.mubr.bf16.gmra.mrb[0].mxu0 %v412
        %v2238 = vpop.f32.mrb[0].mxu0
        %v2239 = vadd.f32 %v2170, %v2238
        %v2240 = vpop.f32.mrb[0].mxu0
        %v2241 = vpop.f32.mrb[0].mxu0
        %v2242 = vadd.f32 %v2170, %v2241
        %v2243 = vpop.f32.mrb[0].mxu0
        %2244 = vmatprep.mubr.bf16.mxu0 0
        %2245 = vmatmul.mubr.bf16.gmra.mrb[0].mxu0 %v413
        %v2246 = vpop.f32.mrb[0].mxu0
        %v2247 = vadd.f32 %v2170, %v2246
        %v2248 = vpop.f32.mrb[0].mxu0
        %v2249 = vpop.f32.mrb[0].mxu0
        %v2250 = vadd.f32 %v2170, %v2249
        %v2251 = vpop.f32.mrb[0].mxu0
        %2252 = vmatprep.mubr.bf16.mxu0 0
        %2253 = vmatmul.mubr.bf16.gmra.mrb[0].mxu0 %v414
        %v2254 = vpop.f32.mrb[0].mxu0
        %v2255 = vadd.f32 %v2170, %v2254
        %v2256 = vpop.f32.mrb[0].mxu0
        %v2257 = vpop.f32.mrb[0].mxu0
        %v2258 = vadd.f32 %v2170, %v2257
        %v2259 = vpop.f32.mrb[0].mxu0
        %2260 = vmatprep.mubr.bf16.mxu0 0
        %2261 = vmatmul.mubr.bf16.gmra.mrb[0].mxu0 %v415
        %v2262 = vpop.f32.mrb[0].mxu0
        %v2263 = vadd.f32 %v2170, %v2262
        %v2264 = vpop.f32.mrb[0].mxu0
        %v2265 = vpop.f32.mrb[0].mxu0
        %v2266 = vadd.f32 %v2170, %v2265
        %v2267 = vpop.f32.mrb[0].mxu0
        %2268 = vdwg.mxu0
        %v2269 = vmax.f32 %v2207, 0.0
        %v2270 = vmax.f32 %v2210, 0.0
        %v2271 = vmax.f32 %v2215, 0.0
        %v2272 = vmax.f32 %v2218, 0.0
        %v2273 = vmax.f32 %v2223, 0.0
        %v2274 = vmax.f32 %v2226, 0.0
        %v2275 = vmax.f32 %v2231, 0.0
        %v2276 = vmax.f32 %v2234, 0.0
        %v2277 = vmax.f32 %v2239, 0.0
        %v2278 = vmax.f32 %v2242, 0.0
        %v2279 = vmax.f32 %v2247, 0.0
        %v2280 = vmax.f32 %v2250, 0.0
        %v2281 = vmax.f32 %v2255, 0.0
        %v2282 = vmax.f32 %v2258, 0.0
        %v2283 = vmax.f32 %v2263, 0.0
        %v2284 = vmax.f32 %v2266, 0.0
        %2285 = vst [vmem:[%s342] sm:$0xff] %v2269
        %2286 = vst [vmem:[%s342 + $0x8] sm:$0xff] %v2270
        %2287 = vst [vmem:[%s342 + $0x10] sm:$0xff] %v2271
        %2288 = vst [vmem:[%s342 + $0x18] sm:$0xff] %v2272
        %2289 = vst [vmem:[%s342 + $0x20] sm:$0xff] %v2273
        %2290 = vst [vmem:[%s342 + $0x28] sm:$0xff] %v2274
        %2291 = vst [vmem:[%s342 + $0x30] sm:$0xff] %v2275
        %2292 = vst [vmem:[%s342 + $0x38] sm:$0xff] %v2276
        %2293 = vst [vmem:[%s342 + $0x40] sm:$0xff] %v2277
        %2294 = vst [vmem:[%s342 + $0x48] sm:$0xff] %v2278
        %2295 = vst [vmem:[%s342 + $0x50] sm:$0xff] %v2279
        %2296 = vst [vmem:[%s342 + $0x58] sm:$0xff] %v2280
        %2297 = vst [vmem:[%s342 + $0x60] sm:$0xff] %v2281
        %2298 = vst [vmem:[%s342 + $0x68] sm:$0xff] %v2282
        %2299 = vst [vmem:[%s342 + $0x70] sm:$0xff] %v2283
        %2300 = vst [vmem:[%s342 + $0x78] sm:$0xff] %v2284
        %p2301 = scmp.lt.s32.totalorder %s20, 1
        %s2302 = scalar_select %p2301, %s20, 1
        %s2303 = smul.addr %s2302, 16
        %s2304 = smul.addr %s2303, 8
        %s2305 = scalar_lea.vmem %s7, %s2304
        // Predicated region
        $region61: #{gcn_forward.1} parent=47 // pred_check
          %p2306 = pneg %p195
        $region62: #{gcn_forward.1} parent=47 // pred_check_branch
          %2308 = sbr.rel (%p2306) target = $region64
        $region63: #{gcn_forward.1} parent=47 // pred_region
          _
        $region64: #{gcn_forward.1} parent=47 // pred_fallthru
          _
      $region48: #{gcn_forward.1} parent=5 // pred_fallthru
        _
      %p2309 = scmp.le.s32.totalorder 2, %s15
      // Predicated region
      $region65: #{gcn_forward.1} parent=5 // pred_check
        %p2310 = pneg %p2309
      $region66: #{gcn_forward.1} parent=5 // pred_check_branch
        %2312 = sbr.rel (%p2310) target = $region68
      $region67: #{gcn_forward.1} parent=5 // pred_region
        %s2313 = ssub.s32 %s15, 2
        // Predicated region
        $region69: #{gcn_forward.1} parent=67 // pred_check
          %p2314 = pneg %p201
        $region70: #{gcn_forward.1} parent=67 // pred_check_branch
          %2316 = sbr.rel (%p2314) target = $region72
        $region71: #{gcn_forward.1} parent=67 // pred_region
          %p2317 = scmp.lt.s32.totalorder %s21, 1
          %s2318 = scalar_select %p2317, %s21, 1
          %s2319 = smul.addr %s2318, 16
          %s2320 = smul.addr %s2319, 8
          %s2321 = scalar_lea.vmem %s7, %s2320
        $region72: #{gcn_forward.1} parent=67 // pred_fallthru
          _
      $region68: #{gcn_forward.1} parent=5 // pred_fallthru
        _
    $region6: #{gcn_forward.1} parent=1 // loop_footer
      %s19 = sadd.s32 1, %s15
    $region7: #{gcn_forward.1} parent=1 // loop_footer_branch
      %14 = sbr.rel target = $region3
    $region8: #{gcn_forward.1} parent=1 // loop_exit
      _
    %2322 = vsyncpa [#allocation3], 1
    %s2323 = scalar_lea.sflag [#allocation3], 1
    %2324 = vsyncpa %s2323, 1
    %2325 = vsyncpa [#allocation5], 1

</llo_original>
